<compile_context>
chip_gen: v6e
topology: v6e:2x2x1
jax: 0.10.0
libtpu: 0.0.40
codegen_flags: <defaults>
</compile_context>

<pallas_src>
import functools
import re

import jax
import jax.numpy as jnp
from jax import lax
from jax.experimental import pallas as pl
from jax.experimental.pallas import tpu as pltpu


# --------------------------------------------------------------------------- #
# Kernel
# --------------------------------------------------------------------------- #
def mlp_critic_kernel(obs_ref, w1_ref, w2_ref, vecs_ref, b3_ref, out_ref, *,
                      act_dtype):
    """Fused 3-layer MLP with the batch in the lane dimension.

    obs_ref : (tb, obs_dim)           input tile (f32 or bf16)
    w1_ref  : (H1, obs_dim)           layer-1 weight (same dtype as obs)
    w2_ref  : (H2, H1)                layer-2 weight (act_dtype)
    vecs_ref: (max(H1,H2), 3) f32     column 0 = b1, 1 = b2, 2 = w3
    b3_ref  : (1,) f32 in SMEM        output bias
    out_ref : (1, tb) f32             lane-dense row of values
    """
    H1 = w1_ref.shape[0]
    H2 = w2_ref.shape[0]
    x = obs_ref[...]                                          # (tb, obs_dim)

    # Layer 1: contract obs_dim of W1 (H1, obs_dim) with obs_dim of x
    # (tb, obs_dim) -> (H1, tb); the batch lands in lanes.
    # TODO(synk): inspect with pl.lower_as_mlir whether Mosaic materializes an
    # XLU relayout of the large x operand here; if hot, repack obs instead.
    h1 = lax.dot_general(
        w1_ref[...], x,
        dimension_numbers=(((1,), (1,)), ((), ())),
        preferred_element_type=jnp.float32,
        precision=lax.Precision.HIGHEST)
    b1 = vecs_ref[0:H1, 0:1]                                  # (H1, 1) f32
    h1 = jnp.tanh((h1 + b1).astype(act_dtype))                # (H1, tb)

    # Layer 2: (H2, H1) @ (H1, tb) -> (H2, tb); bf16 x bf16 with f32
    # accumulation when act_dtype is bf16 (v6e/v7x).
    h2 = jnp.dot(w2_ref[...], h1,
                 preferred_element_type=jnp.float32,
                 precision=lax.Precision.HIGHEST)
    b2 = vecs_ref[0:H2, 1:2]                                  # (H2, 1) f32
    h2 = jnp.tanh((h2 + b2).astype(act_dtype))                # (H2, tb)

    # Layer 3 (output dim 1): VPU multiply + sublane reduce instead of a
    # degenerate single-column MXU matmul. Identity output activation.
    w3 = vecs_ref[0:H2, 2:3]                                  # (H2, 1) f32
    v = jnp.sum(h2 * w3, axis=0, keepdims=True)               # (1, tb) f32
    v = v + b3_ref[0]                                         # SMEM scalar bias
    out_ref[...] = v.astype(out_ref.dtype)


# --------------------------------------------------------------------------- #
# Wrapper / heuristics
# --------------------------------------------------------------------------- #
def _round_up(x, m):
    return ((x + m - 1) // m) * m


def _chip_info():
    """Returns (tpu_generation or None, multi_tensorcore, vmem_budget_bytes)."""
    version = None
    kind = ""
    try:
        kind = (getattr(jax.devices()[0], "device_kind", "") or "").lower()
        m = re.search(r"v(\d+)", kind)
        if m:
            version = int(m.group(1))
    except Exception:
        pass
    is_lite = ("lite" in kind) or kind.rstrip().endswith("e")
    # Megacore / multi-TC chips: v4, v5p, v7x (2 TCs share work on "parallel").
    multi_core = version is not None and (
        version >= 7 or version == 4 or (version == 5 and not is_lite))
    # VMEM budget we allow ourselves (scoped).  v7x only has 64 MiB physical;
    # v4/v5/v6 have 128 MiB; v2/v3 are tiny; unknown -> conservative.
    if version is not None and version in (4, 5, 6):
        vmem_budget = 64 << 20
    elif version is not None and version in (2, 3):
        vmem_budget = 8 << 20
    else:
        vmem_budget = 40 << 20
    return version, multi_core, vmem_budget


def default_activation_dtype():
    """bf16 tanh/activations on chips with bf16 VPU/EUP (v6e+); else f32."""
    version, _, _ = _chip_info()
    return jnp.bfloat16 if (version is not None and version >= 6) else jnp.float32


def mlp_critic_forward(obs, params, *, block_b=None, activation_dtype=None,
                       min_pallas_batch=512):
    """Runs the fused MLPCritic kernel. obs: (B, obs_dim) -> returns (B,)."""
    w1, b1, w2, b2, w3, b3 = params          # PyTorch convention: W is (out, in)
    B, obs_dim = obs.shape
    H1, H2 = w1.shape[0], w2.shape[0]

    # Small-batch fast path: fixed pallas_call / padding cost exceeds the work
    # for tiny PPO minibatches; XLA's fused GEMM path is faster there.
    if block_b is None and B < min_pallas_batch:
        return reference_forward(obs, params)

    version, multi_core, vmem_budget = _chip_info()
    if activation_dtype is None:
        activation_dtype = default_activation_dtype()

    # obs may already be stored in bf16 upstream (halves the dominant HBM
    # stream); don't add a wrapper-side cast pass for f32/bf16 inputs.
    in_dtype = obs.dtype if obs.dtype in (jnp.bfloat16, jnp.float32) else jnp.float32
    in_bytes = jnp.dtype(in_dtype).itemsize
    act_bytes = jnp.dtype(activation_dtype).itemsize

    # ---- batch-tile selection with explicit VMEM accounting ---------------
    # Per-row VMEM bytes: the (tb, obs_dim) obs block is lane-padded to 128 and
    # double-buffered; add the (1, tb) output buffers and activation temps.
    obs_lanes = _round_up(obs_dim, 128)
    per_row = (2 * obs_lanes * in_bytes            # obs stream, 2 pipeline bufs
               + 2 * 8 * 4                         # (1, tb) out, sublane-padded
               + 4 * (H1 + H2) * 4                 # pre-activation f32 temps
               + 2 * (H1 + H2) * act_bytes)        # post-tanh activations
    if block_b is not None:
        tb = max(128, _round_up(block_b, 128))
    else:
        cap = max(128, ((int(0.85 * vmem_budget) // per_row) // 128) * 128)
        cap = min(cap, 16384)                      # review: 8K-16K sweet spot
        tb = min(cap, _round_up(B, 128))
        # Only split a lone tile in two on multi-TensorCore chips (keeps the
        # grid step count even so neither core idles); on 1-TC chips a split
        # just adds another ~0.35us serial step and extra padding.
        if multi_core and tb >= 256 and _round_up(B, tb) // tb == 1:
            tb = _round_up(tb // 2, 128)

    B_pad = pl.cdiv(B, tb) * tb
    grid = (B_pad // tb,)

    obs_p = obs if obs.dtype == in_dtype else obs.astype(in_dtype)
    if B_pad != B:
        obs_p = jnp.pad(obs_p, ((0, B_pad - B), (0, 0)))

    # ---- parameter layouts -------------------------------------------------
    w1c = w1.astype(in_dtype)                      # matches obs dtype on the MXU
    w2c = w2.astype(activation_dtype)              # bf16 into layer-2 MXU (v6e+)
    Hmax = max(H1, H2)
    vecs = jnp.zeros((Hmax, 3), jnp.float32)       # packed [b1 | b2 | w3]
    vecs = vecs.at[:H1, 0].set(b1.reshape(H1).astype(jnp.float32))
    vecs = vecs.at[:H2, 1].set(b2.reshape(H2).astype(jnp.float32))
    vecs = vecs.at[:H2, 2].set(w3.reshape(H2).astype(jnp.float32))
    b3s = b3.reshape(1).astype(jnp.float32)        # scalar bias -> SMEM

    cost = pl.CostEstimate(
        flops=2 * B_pad * (obs_dim * H1 + H1 * H2 + H2),
        transcendentals=B_pad * (H1 + H2),
        bytes_accessed=(B_pad * obs_dim * in_bytes + B_pad * 4
                        + w1c.size * in_bytes + w2c.size * act_bytes
                        + vecs.size * 4 + 4),
    )

    kernel = functools.partial(mlp_critic_kernel, act_dtype=activation_dtype)

    out = pl.pallas_call(
        kernel,
        out_shape=jax.ShapeDtypeStruct((1, B_pad), jnp.float32),
        grid_spec=pltpu.PrefetchScalarGridSpec(
            num_scalar_prefetch=0,
            grid=grid,
            in_specs=[
                pl.BlockSpec((tb, obs_dim), lambda i: (i, 0)),      # obs tile
                pl.BlockSpec((H1, obs_dim), lambda i: (0, 0)),      # W1 resident
                pl.BlockSpec((H2, H1), lambda i: (0, 0)),           # W2 resident
                pl.BlockSpec((Hmax, 3), lambda i: (0, 0)),          # b1|b2|w3
                pl.BlockSpec(memory_space=pltpu.MemorySpace.SMEM),  # b3 scalar
            ],
            out_specs=pl.BlockSpec((1, tb), lambda i: (0, i)),      # lane-dense
        ),
        compiler_params=pltpu.CompilerParams(
            dimension_semantics=("parallel",),
            vmem_limit_bytes=vmem_budget),
        cost_estimate=cost,
    )(obs_p, w1c, w2c, vecs, b3s)

    # torch.squeeze(..., -1): (1, B_pad) row -> (B,)
    return out[0, :B]


# --------------------------------------------------------------------------- #
# Reference + init
# --------------------------------------------------------------------------- #
def init_params(key, obs_dim, hidden_sizes):
    """Deterministic init mirroring nn.Linear defaults (W: (out,in), b: (out,))."""
    sizes = [obs_dim] + list(hidden_sizes) + [1]
    params = []
    for j in range(len(sizes) - 1):
        fan_in, fan_out = sizes[j], sizes[j + 1]
        key, kw, kb = jax.random.split(key, 3)
        bound = 1.0 / jnp.sqrt(jnp.float32(fan_in))
        w = jax.random.uniform(kw, (fan_out, fan_in), jnp.float32, -bound, bound)
        b = jax.random.uniform(kb, (fan_out,), jnp.float32, -bound, bound)
        params += [w, b]
    return tuple(params)


def reference_forward(obs, params):
    """Plain-JAX f32 reference of the same MLP (tanh hidden, identity output)."""
    w1, b1, w2, b2, w3, b3 = params
    x = obs.astype(jnp.float32)
    h = jnp.tanh(jnp.dot(x, w1.T, precision=lax.Precision.HIGHEST) + b1)
    h = jnp.tanh(jnp.dot(h, w2.T, precision=lax.Precision.HIGHEST) + b2)
    v = jnp.dot(h, w3.T, precision=lax.Precision.HIGHEST) + b3
    return jnp.squeeze(v, -1)


# --------------------------------------------------------------------------- #
# Demo / correctness check
# --------------------------------------------------------------------------- #
if __name__ == "__main__":
    # Standard PPO critic setup: obs_dim=16, hidden_sizes=(32, 32), Tanh.
    B, OBS_DIM = 8, 16
    HIDDEN = (32, 32)

    key = jax.random.PRNGKey(0)
    key, kobs, kobs2 = jax.random.split(key, 3)
    params = init_params(key, OBS_DIM, HIDDEN)

    # (1) Strict f32 Pallas path at the tiny demo batch (force the kernel).
    obs = jax.random.normal(kobs, (B, OBS_DIM), jnp.float32)
    v = jax.block_until_ready(
        mlp_critic_forward(obs, params, min_pallas_batch=0,
                           activation_dtype=jnp.float32))
    v_ref = reference_forward(obs, params)
    assert v.shape == (B,), v.shape
    assert jnp.allclose(v, v_ref, atol=1e-5, rtol=1e-5), (v, v_ref)

    # (2) Generation-default path (bf16 tanh on v6e/v7x) with batch padding.
    B2 = 300
    obs2 = jax.random.normal(kobs2, (B2, OBS_DIM), jnp.float32)
    v2 = jax.block_until_ready(
        mlp_critic_forward(obs2, params, min_pallas_batch=0))
    v2_ref = reference_forward(obs2, params)
    tol = 1e-5 if default_activation_dtype() == jnp.float32 else 5e-2
    assert v2.shape == (B2,), v2.shape
    assert jnp.allclose(v2, v2_ref, atol=tol, rtol=tol), \
        float(jnp.max(jnp.abs(v2 - v2_ref)))

    # (3) Small-batch fast path (plain jnp, no Pallas) sanity check.
    v3 = jax.block_until_ready(mlp_critic_forward(obs, params))
    assert jnp.allclose(v3, v_ref, atol=1e-5, rtol=1e-5)

    print("KERNEL_OK")
</pallas_src>

<mosaic_0001>
module attributes {stable_mosaic.version = 11 : i64} {
  func.func @mlp_critic_kernel(%arg0: i32, %arg1: memref<128x16xf32, #tpu.memory_space<vmem>>, %arg2: memref<32x16xf32, #tpu.memory_space<vmem>>, %arg3: memref<32x32xf32, #tpu.memory_space<vmem>>, %arg4: memref<32x3xf32, #tpu.memory_space<vmem>>, %arg5: memref<1xf32, #tpu.memory_space<smem>>, %arg6: memref<1x128xf32, #tpu.memory_space<vmem>>) attributes {dimension_semantics = [#tpu.dimension_semantics<parallel>], iteration_bounds = array<i64: 1>, scalar_prefetch = 0 : i64, scratch_operands = 0 : i64, tpu.core_type = #tpu.core_type<tc>, window_params = [{transform_indices = @transform_0, window_bounds = array<i64: 128, 16>}, {pipeline_mode = #tpu.pipeline_mode<synchronous>, transform_indices = @transform_1, window_bounds = array<i64: 32, 16>}, {pipeline_mode = #tpu.pipeline_mode<synchronous>, transform_indices = @transform_2, window_bounds = array<i64: 32, 32>}, {pipeline_mode = #tpu.pipeline_mode<synchronous>, transform_indices = @transform_3, window_bounds = array<i64: 32, 3>}, {transform_indices = @transform_4, window_bounds = array<i64: 1>}, {transform_indices = @transform_5, window_bounds = array<i64: 1, 128>}]} {
    %c0 = arith.constant 0 : index
    %c0_0 = arith.constant 0 : index
    %0 = vector.load %arg1[%c0, %c0_0] : memref<128x16xf32, #tpu.memory_space<vmem>>, vector<128x16xf32>
    %c0_1 = arith.constant 0 : index
    %c0_2 = arith.constant 0 : index
    %1 = vector.load %arg2[%c0_1, %c0_2] : memref<32x16xf32, #tpu.memory_space<vmem>>, vector<32x16xf32>
    %cst = arith.constant dense<0.000000e+00> : vector<32x128xf32>
    %2 = tpu.matmul %1, %0, %cst {dimension_numbers = #tpu.dot_dimension_numbers<[1], [1], [0], [0], [0, 0, 1, 0], [], []>, precision = #tpu.contract_precision<fp32>} : vector<32x16xf32>, vector<128x16xf32>, vector<32x128xf32> -> vector<32x128xf32>
    %c0_3 = arith.constant 0 : index
    %c0_4 = arith.constant 0 : index
    %3 = vector.load %arg4[%c0_3, %c0_4] : memref<32x3xf32, #tpu.memory_space<vmem>>, vector<32x1xf32>
    %4 = vector.broadcast %3 : vector<32x1xf32> to vector<32x128xf32>
    %5 = arith.addf %2, %4 : vector<32x128xf32>
    %6 = math.tanh %5 : vector<32x128xf32>
    %c0_5 = arith.constant 0 : index
    %c0_6 = arith.constant 0 : index
    %7 = vector.load %arg3[%c0_5, %c0_6] : memref<32x32xf32, #tpu.memory_space<vmem>>, vector<32x32xf32>
    %cst_7 = arith.constant dense<0.000000e+00> : vector<32x128xf32>
    %8 = tpu.matmul %7, %6, %cst_7 {dimension_numbers = #tpu.dot_dimension_numbers<[1], [0], [0], [1], [0, 0, 1, 1], [], []>, precision = #tpu.contract_precision<fp32>} : vector<32x32xf32>, vector<32x128xf32>, vector<32x128xf32> -> vector<32x128xf32>
    %c0_8 = arith.constant 0 : index
    %c1 = arith.constant 1 : index
    %9 = vector.load %arg4[%c0_8, %c1] : memref<32x3xf32, #tpu.memory_space<vmem>>, vector<32x1xf32>
    %10 = vector.broadcast %9 : vector<32x1xf32> to vector<32x128xf32>
    %11 = arith.addf %8, %10 : vector<32x128xf32>
    %12 = math.tanh %11 : vector<32x128xf32>
    %c0_9 = arith.constant 0 : index
    %c2 = arith.constant 2 : index
    %13 = vector.load %arg4[%c0_9, %c2] : memref<32x3xf32, #tpu.memory_space<vmem>>, vector<32x1xf32>
    %14 = vector.broadcast %13 : vector<32x1xf32> to vector<32x128xf32>
    %15 = arith.mulf %12, %14 : vector<32x128xf32>
    %cst_10 = arith.constant dense<0.000000e+00> : vector<128xf32>
    %16 = vector.multi_reduction <add>, %15, %cst_10 [0] : vector<32x128xf32> to vector<128xf32>
    %17 = vector.shape_cast %16 : vector<128xf32> to vector<1x128xf32>
    %c0_11 = arith.constant 0 : index
    %18 = memref.load %arg5[%c0_11] : memref<1xf32, #tpu.memory_space<smem>>
    %19 = vector.broadcast %18 : f32 to vector<1x128xf32>
    %20 = arith.addf %17, %19 : vector<1x128xf32>
    %c0_12 = arith.constant 0 : index
    %c0_13 = arith.constant 0 : index
    %21 = vector.load %arg6[%c0_12, %c0_13] : memref<1x128xf32, #tpu.memory_space<vmem>>, vector<1x128xf32>
    tpu.vector_store %arg6[%c0_12, %c0_13], %20 {strides = array<i32>} : memref<1x128xf32, #tpu.memory_space<vmem>>, vector<1x128xf32>,
    return
  }
  func.func @transform_0(%arg0: i32) -> (i32, i32) {
    %c0_i32 = arith.constant 0 : i32
    %c0_i32_0 = arith.constant 0 : i32
    return %arg0, %c0_i32 : i32, i32
  }
  func.func @transform_1(%arg0: i32) -> (i32, i32) {
    %c0_i32 = arith.constant 0 : i32
    %c0_i32_0 = arith.constant 0 : i32
    %c0_i32_1 = arith.constant 0 : i32
    return %c0_i32, %c0_i32_0 : i32, i32
  }
  func.func @transform_2(%arg0: i32) -> (i32, i32) {
    %c0_i32 = arith.constant 0 : i32
    %c0_i32_0 = arith.constant 0 : i32
    %c0_i32_1 = arith.constant 0 : i32
    return %c0_i32, %c0_i32_0 : i32, i32
  }
  func.func @transform_3(%arg0: i32) -> (i32, i32) {
    %c0_i32 = arith.constant 0 : i32
    %c0_i32_0 = arith.constant 0 : i32
    %c0_i32_1 = arith.constant 0 : i32
    return %c0_i32, %c0_i32_0 : i32, i32
  }
  func.func @transform_4(%arg0: i32) -> i32 {
    %c0_i32 = arith.constant 0 : i32
    %c0_i32_0 = arith.constant 0 : i32
    return %c0_i32 : i32
  }
  func.func @transform_5(%arg0: i32) -> (i32, i32) {
    %c0_i32 = arith.constant 0 : i32
    %c0_i32_0 = arith.constant 0 : i32
    return %c0_i32, %arg0 : i32, i32
  }
}

</mosaic_0001>

<llo_original>
// kernel: tpu_custom_call.1
$region0: #{tpu_custom_call.1}
  #allocation0 [shape = 'u32[]', space=smem, size = 0x4, offset = 0x4, fixed_abs, tag = 'smem constant byte address 0x4 - core index']
  #allocation1 [shape = 'u32[144,128]{1,0:T(1,128)}', space=vmem, size = 0x12000, scoped, tag = 'internal scratch']
  #allocation2 [shape = 'f32[1]{0:T(128)S(6)}', space=smem, size = 0x200, scoped, tag = 'scoped memory for tpu_custom_call.1']
  %s0 = inlined_call_operand.vmem [shape: f32[128,16], index: 0, kind: input, shape index: {}]
  %s1 = inlined_call_operand.vmem [shape: f32[32,16], index: 1, kind: input, shape index: {}]
  %s2 = inlined_call_operand.vmem [shape: f32[32,32], index: 2, kind: input, shape index: {}]
  %s3 = inlined_call_operand.vmem [shape: f32[32,3], index: 3, kind: input, shape index: {}]
  %s4 = inlined_call_operand.<no memory space> [shape: f32[1], index: 4, kind: input, shape index: {}]
  %s5 = inlined_call_operand.hbm [shape: f32[1,128], index: 5, kind: output, shape index: {}]
  %s6 = sld [smem:[#allocation0]]
  $region30: #{tpu_custom_call.1} parent=0
    _
  %s8 = ssub.s32 1, %s6
  %s9 = scalar_select 0, %s8, %s6
  %10 = sst [smem:[#allocation2]] %s4
  $region1: #{tpu_custom_call.1} parent=0
    #allocation3 [shape = 'u8[512]{0}', space=vmem, size = 0x400, scoped, tag = 'output window, operand 0, single buffered']
    #allocation4 [shape = 's32[1]{0}', space=sflag, size = 0x4, scoped, tag = 'scoped memory for tpu_custom_call.1']
    %11 = vsyncpa [#allocation4], 0
    // Predicated region
    $region2: #{tpu_custom_call.1} parent=1 // pred_check
      _
    $region3: #{tpu_custom_call.1} parent=1 // pred_check_branch
      %13 = sbr.rel (0) target = $region5
    $region4: #{tpu_custom_call.1} parent=1 // pred_region
      _
    $region5: #{tpu_custom_call.1} parent=1 // pred_fallthru
      _
    // Predicated region
    $region6: #{tpu_custom_call.1} parent=1 // pred_check
      _
    $region7: #{tpu_custom_call.1} parent=1 // pred_check_branch
      %15 = sbr.rel (0) target = $region9
    $region8: #{tpu_custom_call.1} parent=1 // pred_region
      _
    $region9: #{tpu_custom_call.1} parent=1 // pred_fallthru
      _
    // Predicated region
    $region10: #{tpu_custom_call.1} parent=1 // pred_check
      _
    $region11: #{tpu_custom_call.1} parent=1 // pred_check_branch
      %17 = sbr.rel (0) target = $region13
    $region12: #{tpu_custom_call.1} parent=1 // pred_region
      _
    $region13: #{tpu_custom_call.1} parent=1 // pred_fallthru
      _
    // Predicated region
    $region14: #{tpu_custom_call.1} parent=1 // pred_check
      _
    $region15: #{tpu_custom_call.1} parent=1 // pred_check_branch
      %19 = sbr.rel (0) target = $region17
    $region16: #{tpu_custom_call.1} parent=1 // pred_region
      _
    $region17: #{tpu_custom_call.1} parent=1 // pred_fallthru
      _
    // Predicated region
    $region18: #{tpu_custom_call.1} parent=1 // pred_check
      _
    $region19: #{tpu_custom_call.1} parent=1 // pred_check_branch
      %21 = sbr.rel (0) target = $region21
    $region20: #{tpu_custom_call.1} parent=1 // pred_region
      _
    $region21: #{tpu_custom_call.1} parent=1 // pred_fallthru
      _
    %v22 = vld [vmem:[%s0] sm:$0xff]
    %v23 = vld [vmem:[%s0 + $0x8] sm:$0xff]
    %v24 = vld [vmem:[%s0 + $0x10] sm:$0xff]
    %v25 = vld [vmem:[%s0 + $0x18] sm:$0xff]
    %v26 = vld [vmem:[%s0 + $0x20] sm:$0xff]
    %v27 = vld [vmem:[%s0 + $0x28] sm:$0xff]
    %v28 = vld [vmem:[%s0 + $0x30] sm:$0xff]
    %v29 = vld [vmem:[%s0 + $0x38] sm:$0xff]
    %v30 = vld [vmem:[%s0 + $0x40] sm:$0xff]
    %v31 = vld [vmem:[%s0 + $0x48] sm:$0xff]
    %v32 = vld [vmem:[%s0 + $0x50] sm:$0xff]
    %v33 = vld [vmem:[%s0 + $0x58] sm:$0xff]
    %v34 = vld [vmem:[%s0 + $0x60] sm:$0xff]
    %v35 = vld [vmem:[%s0 + $0x68] sm:$0xff]
    %v36 = vld [vmem:[%s0 + $0x70] sm:$0xff]
    %v37 = vld [vmem:[%s0 + $0x78] sm:$0xff]
    %v38 = vld [vmem:[%s1] sm:$0xff]
    %v39 = vld [vmem:[%s1 + $0x8] sm:$0xff]
    %v40 = vld [vmem:[%s1 + $0x10] sm:$0xff]
    %v41 = vld [vmem:[%s1 + $0x18] sm:$0xff]
    %v42 = vld [vmem:[%s3] sm:$0xff]
    %v43 = vld [vmem:[%s3 + $0x8] sm:$0xff]
    %v44 = vld [vmem:[%s3 + $0x10] sm:$0xff]
    %v45 = vld [vmem:[%s3 + $0x18] sm:$0xff]
    %47 = vset.pattern.permute.xlu0 0
    %48 = vperm.xlu0 %47, %v42
    %v49 = vpop.permute.xlu0 %48
    %52 = vset.pattern.permute.xlu0 0
    %53 = vperm.xlu0 %52, %v43
    %v54 = vpop.permute.xlu0 %53
    %57 = vset.pattern.permute.xlu0 0
    %58 = vperm.xlu0 %57, %v44
    %v59 = vpop.permute.xlu0 %58
    %62 = vset.pattern.permute.xlu0 0
    %63 = vperm.xlu0 %62, %v45
    %v64 = vpop.permute.xlu0 %63
    %vm66 = vcmask 130048
    %v68 = vsel %vm66, %v38, 0
    %v71 = vsel %vm66, %v39, 0
    %v74 = vsel %vm66, %v40, 0
    %v77 = vsel %vm66, %v41, 0
    %v80 = vsel %vm66, %v22, 0
    %v83 = vsel %vm66, %v23, 0
    %v86 = vsel %vm66, %v24, 0
    %v89 = vsel %vm66, %v25, 0
    %v92 = vsel %vm66, %v26, 0
    %v95 = vsel %vm66, %v27, 0
    %v98 = vsel %vm66, %v28, 0
    %v101 = vsel %vm66, %v29, 0
    %v104 = vsel %vm66, %v30, 0
    %v107 = vsel %vm66, %v31, 0
    %v110 = vsel %vm66, %v32, 0
    %v113 = vsel %vm66, %v33, 0
    %v116 = vsel %vm66, %v34, 0
    %v119 = vsel %vm66, %v35, 0
    %v122 = vsel %vm66, %v36, 0
    %v125 = vsel %vm66, %v37, 0
    %127 = vmatprep.subr.mxu0 0.0
    %v128 = vand.u32 %v125, 4294901760
    %129 = vmatpush1.xpose.msra.mxu0 %v128
    %130 = vmatprep.subr.mxu0 0.0
    %v131 = vand.u32 %v122, 4294901760
    %132 = vmatpush1.xpose.msra.mxu0 %v131
    %133 = vmatprep.subr.mxu0 0.0
    %v134 = vand.u32 %v119, 4294901760
    %135 = vmatpush1.xpose.msra.mxu0 %v134
    %136 = vmatprep.subr.mxu0 0.0
    %v137 = vand.u32 %v116, 4294901760
    %138 = vmatpush1.xpose.msra.mxu0 %v137
    %139 = vmatprep.subr.mxu0 0.0
    %v140 = vand.u32 %v113, 4294901760
    %141 = vmatpush1.xpose.msra.mxu0 %v140
    %142 = vmatprep.subr.mxu0 0.0
    %v143 = vand.u32 %v110, 4294901760
    %144 = vmatpush1.xpose.msra.mxu0 %v143
    %145 = vmatprep.subr.mxu0 0.0
    %v146 = vand.u32 %v107, 4294901760
    %147 = vmatpush1.xpose.msra.mxu0 %v146
    %148 = vmatprep.subr.mxu0 0.0
    %v149 = vand.u32 %v104, 4294901760
    %150 = vmatpush1.xpose.msra.mxu0 %v149
    %151 = vmatprep.subr.mxu0 0.0
    %v152 = vand.u32 %v101, 4294901760
    %153 = vmatpush1.xpose.msra.mxu0 %v152
    %154 = vmatprep.subr.mxu0 0.0
    %v155 = vand.u32 %v98, 4294901760
    %156 = vmatpush1.xpose.msra.mxu0 %v155
    %157 = vmatprep.subr.mxu0 0.0
    %v158 = vand.u32 %v95, 4294901760
    %159 = vmatpush1.xpose.msra.mxu0 %v158
    %160 = vmatprep.subr.mxu0 0.0
    %v161 = vand.u32 %v92, 4294901760
    %162 = vmatpush1.xpose.msra.mxu0 %v161
    %163 = vmatprep.subr.mxu0 0.0
    %v164 = vand.u32 %v89, 4294901760
    %165 = vmatpush1.xpose.msra.mxu0 %v164
    %166 = vmatprep.subr.mxu0 0.0
    %v167 = vand.u32 %v86, 4294901760
    %168 = vmatpush1.xpose.msra.mxu0 %v167
    %169 = vmatprep.subr.mxu0 0.0
    %v170 = vand.u32 %v83, 4294901760
    %171 = vmatpush1.xpose.msra.mxu0 %v170
    %172 = vmatprep.subr.mxu0 0.0
    %v173 = vand.u32 %v80, 4294901760
    %174 = vmatpush1.xpose.msra.mxu0 %v173
    %175 = vmatprep.subr.mxu0 0.0
    %176 = vmatpush2.xpose.msra.mxu0 0.0
    %177 = vmatprep.subr.mxu0 0.0
    %178 = vmatpush2.xpose.msra.mxu0 0.0
    %179 = vmatprep.subr.mxu0 0.0
    %180 = vmatpush2.xpose.msra.mxu0 0.0
    %181 = vmatprep.subr.mxu0 0.0
    %182 = vmatpush2.xpose.msra.mxu0 0.0
    %183 = vmatprep.subr.mxu0 0.0
    %184 = vmatpush2.xpose.msra.mxu0 0.0
    %185 = vmatprep.subr.mxu0 0.0
    %186 = vmatpush2.xpose.msra.mxu0 0.0
    %187 = vmatprep.subr.mxu0 0.0
    %188 = vmatpush2.xpose.msra.mxu0 0.0
    %189 = vmatprep.subr.mxu0 0.0
    %190 = vmatpush2.xpose.msra.mxu0 0.0
    %191 = vmatprep.subr.mxu0 0.0
    %192 = vmatpush2.xpose.msra.mxu0 0.0
    %193 = vmatprep.subr.mxu0 0.0
    %194 = vmatpush2.xpose.msra.mxu0 0.0
    %195 = vmatprep.subr.mxu0 0.0
    %196 = vmatpush2.xpose.msra.mxu0 0.0
    %197 = vmatprep.subr.mxu0 0.0
    %198 = vmatpush2.xpose.msra.mxu0 0.0
    %199 = vmatprep.subr.mxu0 0.0
    %200 = vmatpush2.xpose.msra.mxu0 0.0
    %201 = vmatprep.subr.mxu0 0.0
    %202 = vmatpush2.xpose.msra.mxu0 0.0
    %203 = vmatprep.subr.mxu0 0.0
    %204 = vmatpush2.xpose.msra.mxu0 0.0
    %205 = vmatprep.subr.mxu0 0.0
    %206 = vmatpush2.xpose.msra.mxu0 0.0
    %207 = vmatprep.mubr.f32.mxu0 0.0
    %v208 = vand.u32 %v68, 4294901760
    %v209 = vsub.f32 %v68, %v208
    %v210 = vand.u32 %v209, 4294901760
    %v211 = vsub.f32 %v209, %v210
    %v212 = vand.u32 %v211, 4294901760
    %213 = vmatmul.mubr.f32.gmra.mxu0 %v212
    %v214 = vpop.f32.mrf.mxu0
    %v215 = vadd.f32 %v49, %v214
    %v216 = vpop.f32.mrf.mxu0
    %217 = vmatprep.mubr.f32.mxu0 0.0
    %v218 = vand.u32 %v71, 4294901760
    %v219 = vsub.f32 %v71, %v218
    %v220 = vand.u32 %v219, 4294901760
    %v221 = vsub.f32 %v219, %v220
    %v222 = vand.u32 %v221, 4294901760
    %223 = vmatmul.mubr.f32.gmra.mxu0 %v222
    %v224 = vpop.f32.mrf.mxu0
    %v225 = vadd.f32 %v54, %v224
    %v226 = vpop.f32.mrf.mxu0
    %227 = vmatprep.mubr.f32.mxu0 0.0
    %v228 = vand.u32 %v74, 4294901760
    %v229 = vsub.f32 %v74, %v228
    %v230 = vand.u32 %v229, 4294901760
    %v231 = vsub.f32 %v229, %v230
    %v232 = vand.u32 %v231, 4294901760
    %233 = vmatmul.mubr.f32.gmra.mxu0 %v232
    %v234 = vpop.f32.mrf.mxu0
    %v235 = vadd.f32 %v59, %v234
    %v236 = vpop.f32.mrf.mxu0
    %237 = vmatprep.mubr.f32.mxu0 0.0
    %v238 = vand.u32 %v77, 4294901760
    %v239 = vsub.f32 %v77, %v238
    %v240 = vand.u32 %v239, 4294901760
    %v241 = vsub.f32 %v239, %v240
    %v242 = vand.u32 %v241, 4294901760
    %243 = vmatmul.mubr.f32.gmra.mxu0 %v242
    %v244 = vpop.f32.mrf.mxu0
    %v245 = vadd.f32 %v64, %v244
    %v246 = vpop.f32.mrf.mxu0
    %247 = vdwg.mxu0
    %248 = vmatprep.subr.mxu0 0.0
    %v249 = vand.u32 %v125, 4294901760
    %v250 = vsub.f32 %v125, %v249
    %v251 = vand.u32 %v250, 4294901760
    %v252 = vsub.f32 %v250, %v251
    %v253 = vand.u32 %v252, 4294901760
    %254 = vmatpush1.xpose.msra.mxu0 %v253
    %255 = vmatprep.subr.mxu0 0.0
    %v256 = vand.u32 %v122, 4294901760
    %v257 = vsub.f32 %v122, %v256
    %v258 = vand.u32 %v257, 4294901760
    %v259 = vsub.f32 %v257, %v258
    %v260 = vand.u32 %v259, 4294901760
    %261 = vmatpush1.xpose.msra.mxu0 %v260
    %262 = vmatprep.subr.mxu0 0.0
    %v263 = vand.u32 %v119, 4294901760
    %v264 = vsub.f32 %v119, %v263
    %v265 = vand.u32 %v264, 4294901760
    %v266 = vsub.f32 %v264, %v265
    %v267 = vand.u32 %v266, 4294901760
    %268 = vmatpush1.xpose.msra.mxu0 %v267
    %269 = vmatprep.subr.mxu0 0.0
    %v270 = vand.u32 %v116, 4294901760
    %v271 = vsub.f32 %v116, %v270
    %v272 = vand.u32 %v271, 4294901760
    %v273 = vsub.f32 %v271, %v272
    %v274 = vand.u32 %v273, 4294901760
    %275 = vmatpush1.xpose.msra.mxu0 %v274
    %276 = vmatprep.subr.mxu0 0.0
    %v277 = vand.u32 %v113, 4294901760
    %v278 = vsub.f32 %v113, %v277
    %v279 = vand.u32 %v278, 4294901760
    %v280 = vsub.f32 %v278, %v279
    %v281 = vand.u32 %v280, 4294901760
    %282 = vmatpush1.xpose.msra.mxu0 %v281
    %283 = vmatprep.subr.mxu0 0.0
    %v284 = vand.u32 %v110, 4294901760
    %v285 = vsub.f32 %v110, %v284
    %v286 = vand.u32 %v285, 4294901760
    %v287 = vsub.f32 %v285, %v286
    %v288 = vand.u32 %v287, 4294901760
    %289 = vmatpush1.xpose.msra.mxu0 %v288
    %290 = vmatprep.subr.mxu0 0.0
    %v291 = vand.u32 %v107, 4294901760
    %v292 = vsub.f32 %v107, %v291
    %v293 = vand.u32 %v292, 4294901760
    %v294 = vsub.f32 %v292, %v293
    %v295 = vand.u32 %v294, 4294901760
    %296 = vmatpush1.xpose.msra.mxu0 %v295
    %297 = vmatprep.subr.mxu0 0.0
    %v298 = vand.u32 %v104, 4294901760
    %v299 = vsub.f32 %v104, %v298
    %v300 = vand.u32 %v299, 4294901760
    %v301 = vsub.f32 %v299, %v300
    %v302 = vand.u32 %v301, 4294901760
    %303 = vmatpush1.xpose.msra.mxu0 %v302
    %304 = vmatprep.subr.mxu0 0.0
    %v305 = vand.u32 %v101, 4294901760
    %v306 = vsub.f32 %v101, %v305
    %v307 = vand.u32 %v306, 4294901760
    %v308 = vsub.f32 %v306, %v307
    %v309 = vand.u32 %v308, 4294901760
    %310 = vmatpush1.xpose.msra.mxu0 %v309
    %311 = vmatprep.subr.mxu0 0.0
    %v312 = vand.u32 %v98, 4294901760
    %v313 = vsub.f32 %v98, %v312
    %v314 = vand.u32 %v313, 4294901760
    %v315 = vsub.f32 %v313, %v314
    %v316 = vand.u32 %v315, 4294901760
    %317 = vmatpush1.xpose.msra.mxu0 %v316
    %318 = vmatprep.subr.mxu0 0.0
    %v319 = vand.u32 %v95, 4294901760
    %v320 = vsub.f32 %v95, %v319
    %v321 = vand.u32 %v320, 4294901760
    %v322 = vsub.f32 %v320, %v321
    %v323 = vand.u32 %v322, 4294901760
    %324 = vmatpush1.xpose.msra.mxu0 %v323
    %325 = vmatprep.subr.mxu0 0.0
    %v326 = vand.u32 %v92, 4294901760
    %v327 = vsub.f32 %v92, %v326
    %v328 = vand.u32 %v327, 4294901760
    %v329 = vsub.f32 %v327, %v328
    %v330 = vand.u32 %v329, 4294901760
    %331 = vmatpush1.xpose.msra.mxu0 %v330
    %332 = vmatprep.subr.mxu0 0.0
    %v333 = vand.u32 %v89, 4294901760
    %v334 = vsub.f32 %v89, %v333
    %v335 = vand.u32 %v334, 4294901760
    %v336 = vsub.f32 %v334, %v335
    %v337 = vand.u32 %v336, 4294901760
    %338 = vmatpush1.xpose.msra.mxu0 %v337
    %339 = vmatprep.subr.mxu0 0.0
    %v340 = vand.u32 %v86, 4294901760
    %v341 = vsub.f32 %v86, %v340
    %v342 = vand.u32 %v341, 4294901760
    %v343 = vsub.f32 %v341, %v342
    %v344 = vand.u32 %v343, 4294901760
    %345 = vmatpush1.xpose.msra.mxu0 %v344
    %346 = vmatprep.subr.mxu0 0.0
    %v347 = vand.u32 %v83, 4294901760
    %v348 = vsub.f32 %v83, %v347
    %v349 = vand.u32 %v348, 4294901760
    %v350 = vsub.f32 %v348, %v349
    %v351 = vand.u32 %v350, 4294901760
    %352 = vmatpush1.xpose.msra.mxu0 %v351
    %353 = vmatprep.subr.mxu0 0.0
    %v354 = vand.u32 %v80, 4294901760
    %v355 = vsub.f32 %v80, %v354
    %v356 = vand.u32 %v355, 4294901760
    %v357 = vsub.f32 %v355, %v356
    %v358 = vand.u32 %v357, 4294901760
    %359 = vmatpush1.xpose.msra.mxu0 %v358
    %360 = vmatprep.subr.mxu0 0.0
    %361 = vmatpush2.xpose.msra.mxu0 0.0
    %362 = vmatprep.subr.mxu0 0.0
    %363 = vmatpush2.xpose.msra.mxu0 0.0
    %364 = vmatprep.subr.mxu0 0.0
    %365 = vmatpush2.xpose.msra.mxu0 0.0
    %366 = vmatprep.subr.mxu0 0.0
    %367 = vmatpush2.xpose.msra.mxu0 0.0
    %368 = vmatprep.subr.mxu0 0.0
    %369 = vmatpush2.xpose.msra.mxu0 0.0
    %370 = vmatprep.subr.mxu0 0.0
    %371 = vmatpush2.xpose.msra.mxu0 0.0
    %372 = vmatprep.subr.mxu0 0.0
    %373 = vmatpush2.xpose.msra.mxu0 0.0
    %374 = vmatprep.subr.mxu0 0.0
    %375 = vmatpush2.xpose.msra.mxu0 0.0
    %376 = vmatprep.subr.mxu0 0.0
    %377 = vmatpush2.xpose.msra.mxu0 0.0
    %378 = vmatprep.subr.mxu0 0.0
    %379 = vmatpush2.xpose.msra.mxu0 0.0
    %380 = vmatprep.subr.mxu0 0.0
    %381 = vmatpush2.xpose.msra.mxu0 0.0
    %382 = vmatprep.subr.mxu0 0.0
    %383 = vmatpush2.xpose.msra.mxu0 0.0
    %384 = vmatprep.subr.mxu0 0.0
    %385 = vmatpush2.xpose.msra.mxu0 0.0
    %386 = vmatprep.subr.mxu0 0.0
    %387 = vmatpush2.xpose.msra.mxu0 0.0
    %388 = vmatprep.subr.mxu0 0.0
    %389 = vmatpush2.xpose.msra.mxu0 0.0
    %390 = vmatprep.subr.mxu0 0.0
    %391 = vmatpush2.xpose.msra.mxu0 0.0
    %392 = vmatprep.mubr.f32.mxu0 0.0
    %v393 = vand.u32 %v68, 4294901760
    %394 = vmatmul.mubr.f32.gmra.mxu0 %v393
    %v395 = vpop.f32.mrf.mxu0
    %v396 = vadd.f32 %v215, %v395
    %v397 = vpop.f32.mrf.mxu0
    %398 = vmatprep.mubr.f32.mxu0 0.0
    %v399 = vand.u32 %v71, 4294901760
    %400 = vmatmul.mubr.f32.gmra.mxu0 %v399
    %v401 = vpop.f32.mrf.mxu0
    %v402 = vadd.f32 %v225, %v401
    %v403 = vpop.f32.mrf.mxu0
    %404 = vmatprep.mubr.f32.mxu0 0.0
    %v405 = vand.u32 %v74, 4294901760
    %406 = vmatmul.mubr.f32.gmra.mxu0 %v405
    %v407 = vpop.f32.mrf.mxu0
    %v408 = vadd.f32 %v235, %v407
    %v409 = vpop.f32.mrf.mxu0
    %410 = vmatprep.mubr.f32.mxu0 0.0
    %v411 = vand.u32 %v77, 4294901760
    %412 = vmatmul.mubr.f32.gmra.mxu0 %v411
    %v413 = vpop.f32.mrf.mxu0
    %v414 = vadd.f32 %v245, %v413
    %v415 = vpop.f32.mrf.mxu0
    %416 = vdwg.mxu0
    %417 = vmatprep.subr.mxu0 0.0
    %v418 = vand.u32 %v125, 4294901760
    %v419 = vsub.f32 %v125, %v418
    %420 = vmatpush1.xpose.msra.mxu0 %v419
    %421 = vmatprep.subr.mxu0 0.0
    %v422 = vand.u32 %v122, 4294901760
    %v423 = vsub.f32 %v122, %v422
    %424 = vmatpush1.xpose.msra.mxu0 %v423
    %425 = vmatprep.subr.mxu0 0.0
    %v426 = vand.u32 %v119, 4294901760
    %v427 = vsub.f32 %v119, %v426
    %428 = vmatpush1.xpose.msra.mxu0 %v427
    %429 = vmatprep.subr.mxu0 0.0
    %v430 = vand.u32 %v116, 4294901760
    %v431 = vsub.f32 %v116, %v430
    %432 = vmatpush1.xpose.msra.mxu0 %v431
    %433 = vmatprep.subr.mxu0 0.0
    %v434 = vand.u32 %v113, 4294901760
    %v435 = vsub.f32 %v113, %v434
    %436 = vmatpush1.xpose.msra.mxu0 %v435
    %437 = vmatprep.subr.mxu0 0.0
    %v438 = vand.u32 %v110, 4294901760
    %v439 = vsub.f32 %v110, %v438
    %440 = vmatpush1.xpose.msra.mxu0 %v439
    %441 = vmatprep.subr.mxu0 0.0
    %v442 = vand.u32 %v107, 4294901760
    %v443 = vsub.f32 %v107, %v442
    %444 = vmatpush1.xpose.msra.mxu0 %v443
    %445 = vmatprep.subr.mxu0 0.0
    %v446 = vand.u32 %v104, 4294901760
    %v447 = vsub.f32 %v104, %v446
    %448 = vmatpush1.xpose.msra.mxu0 %v447
    %449 = vmatprep.subr.mxu0 0.0
    %v450 = vand.u32 %v101, 4294901760
    %v451 = vsub.f32 %v101, %v450
    %452 = vmatpush1.xpose.msra.mxu0 %v451
    %453 = vmatprep.subr.mxu0 0.0
    %v454 = vand.u32 %v98, 4294901760
    %v455 = vsub.f32 %v98, %v454
    %456 = vmatpush1.xpose.msra.mxu0 %v455
    %457 = vmatprep.subr.mxu0 0.0
    %v458 = vand.u32 %v95, 4294901760
    %v459 = vsub.f32 %v95, %v458
    %460 = vmatpush1.xpose.msra.mxu0 %v459
    %461 = vmatprep.subr.mxu0 0.0
    %v462 = vand.u32 %v92, 4294901760
    %v463 = vsub.f32 %v92, %v462
    %464 = vmatpush1.xpose.msra.mxu0 %v463
    %465 = vmatprep.subr.mxu0 0.0
    %v466 = vand.u32 %v89, 4294901760
    %v467 = vsub.f32 %v89, %v466
    %468 = vmatpush1.xpose.msra.mxu0 %v467
    %469 = vmatprep.subr.mxu0 0.0
    %v470 = vand.u32 %v86, 4294901760
    %v471 = vsub.f32 %v86, %v470
    %472 = vmatpush1.xpose.msra.mxu0 %v471
    %473 = vmatprep.subr.mxu0 0.0
    %v474 = vand.u32 %v83, 4294901760
    %v475 = vsub.f32 %v83, %v474
    %476 = vmatpush1.xpose.msra.mxu0 %v475
    %477 = vmatprep.subr.mxu0 0.0
    %v478 = vand.u32 %v80, 4294901760
    %v479 = vsub.f32 %v80, %v478
    %480 = vmatpush1.xpose.msra.mxu0 %v479
    %481 = vmatprep.subr.mxu0 0.0
    %482 = vmatpush2.xpose.msra.mxu0 0.0
    %483 = vmatprep.subr.mxu0 0.0
    %484 = vmatpush2.xpose.msra.mxu0 0.0
    %485 = vmatprep.subr.mxu0 0.0
    %486 = vmatpush2.xpose.msra.mxu0 0.0
    %487 = vmatprep.subr.mxu0 0.0
    %488 = vmatpush2.xpose.msra.mxu0 0.0
    %489 = vmatprep.subr.mxu0 0.0
    %490 = vmatpush2.xpose.msra.mxu0 0.0
    %491 = vmatprep.subr.mxu0 0.0
    %492 = vmatpush2.xpose.msra.mxu0 0.0
    %493 = vmatprep.subr.mxu0 0.0
    %494 = vmatpush2.xpose.msra.mxu0 0.0
    %495 = vmatprep.subr.mxu0 0.0
    %496 = vmatpush2.xpose.msra.mxu0 0.0
    %497 = vmatprep.subr.mxu0 0.0
    %498 = vmatpush2.xpose.msra.mxu0 0.0
    %499 = vmatprep.subr.mxu0 0.0
    %500 = vmatpush2.xpose.msra.mxu0 0.0
    %501 = vmatprep.subr.mxu0 0.0
    %502 = vmatpush2.xpose.msra.mxu0 0.0
    %503 = vmatprep.subr.mxu0 0.0
    %504 = vmatpush2.xpose.msra.mxu0 0.0
    %505 = vmatprep.subr.mxu0 0.0
    %506 = vmatpush2.xpose.msra.mxu0 0.0
    %507 = vmatprep.subr.mxu0 0.0
    %508 = vmatpush2.xpose.msra.mxu0 0.0
    %509 = vmatprep.subr.mxu0 0.0
    %510 = vmatpush2.xpose.msra.mxu0 0.0
    %511 = vmatprep.subr.mxu0 0.0
    %512 = vmatpush2.xpose.msra.mxu0 0.0
    %513 = vmatprep.mubr.f32.mxu0 0.0
    %v514 = vand.u32 %v68, 4294901760
    %v515 = vsub.f32 %v68, %v514
    %516 = vmatmul.mubr.f32.gmra.mxu0 %v515
    %v517 = vpop.f32.mrf.mxu0
    %v518 = vadd.f32 %v396, %v517
    %v519 = vpop.f32.mrf.mxu0
    %520 = vmatprep.mubr.f32.mxu0 0.0
    %v521 = vand.u32 %v71, 4294901760
    %v522 = vsub.f32 %v71, %v521
    %523 = vmatmul.mubr.f32.gmra.mxu0 %v522
    %v524 = vpop.f32.mrf.mxu0
    %v525 = vadd.f32 %v402, %v524
    %v526 = vpop.f32.mrf.mxu0
    %527 = vmatprep.mubr.f32.mxu0 0.0
    %v528 = vand.u32 %v74, 4294901760
    %v529 = vsub.f32 %v74, %v528
    %530 = vmatmul.mubr.f32.gmra.mxu0 %v529
    %v531 = vpop.f32.mrf.mxu0
    %v532 = vadd.f32 %v408, %v531
    %v533 = vpop.f32.mrf.mxu0
    %534 = vmatprep.mubr.f32.mxu0 0.0
    %v535 = vand.u32 %v77, 4294901760
    %v536 = vsub.f32 %v77, %v535
    %537 = vmatmul.mubr.f32.gmra.mxu0 %v536
    %v538 = vpop.f32.mrf.mxu0
    %v539 = vadd.f32 %v414, %v538
    %v540 = vpop.f32.mrf.mxu0
    %541 = vdwg.mxu0
    %542 = vmatprep.subr.mxu0 0.0
    %v543 = vand.u32 %v125, 4294901760
    %544 = vmatpush1.xpose.msra.mxu0 %v543
    %545 = vmatprep.subr.mxu0 0.0
    %v546 = vand.u32 %v122, 4294901760
    %547 = vmatpush1.xpose.msra.mxu0 %v546
    %548 = vmatprep.subr.mxu0 0.0
    %v549 = vand.u32 %v119, 4294901760
    %550 = vmatpush1.xpose.msra.mxu0 %v549
    %551 = vmatprep.subr.mxu0 0.0
    %v552 = vand.u32 %v116, 4294901760
    %553 = vmatpush1.xpose.msra.mxu0 %v552
    %554 = vmatprep.subr.mxu0 0.0
    %v555 = vand.u32 %v113, 4294901760
    %556 = vmatpush1.xpose.msra.mxu0 %v555
    %557 = vmatprep.subr.mxu0 0.0
    %v558 = vand.u32 %v110, 4294901760
    %559 = vmatpush1.xpose.msra.mxu0 %v558
    %560 = vmatprep.subr.mxu0 0.0
    %v561 = vand.u32 %v107, 4294901760
    %562 = vmatpush1.xpose.msra.mxu0 %v561
    %563 = vmatprep.subr.mxu0 0.0
    %v564 = vand.u32 %v104, 4294901760
    %565 = vmatpush1.xpose.msra.mxu0 %v564
    %566 = vmatprep.subr.mxu0 0.0
    %v567 = vand.u32 %v101, 4294901760
    %568 = vmatpush1.xpose.msra.mxu0 %v567
    %569 = vmatprep.subr.mxu0 0.0
    %v570 = vand.u32 %v98, 4294901760
    %571 = vmatpush1.xpose.msra.mxu0 %v570
    %572 = vmatprep.subr.mxu0 0.0
    %v573 = vand.u32 %v95, 4294901760
    %574 = vmatpush1.xpose.msra.mxu0 %v573
    %575 = vmatprep.subr.mxu0 0.0
    %v576 = vand.u32 %v92, 4294901760
    %577 = vmatpush1.xpose.msra.mxu0 %v576
    %578 = vmatprep.subr.mxu0 0.0
    %v579 = vand.u32 %v89, 4294901760
    %580 = vmatpush1.xpose.msra.mxu0 %v579
    %581 = vmatprep.subr.mxu0 0.0
    %v582 = vand.u32 %v86, 4294901760
    %583 = vmatpush1.xpose.msra.mxu0 %v582
    %584 = vmatprep.subr.mxu0 0.0
    %v585 = vand.u32 %v83, 4294901760
    %586 = vmatpush1.xpose.msra.mxu0 %v585
    %587 = vmatprep.subr.mxu0 0.0
    %v588 = vand.u32 %v80, 4294901760
    %589 = vmatpush1.xpose.msra.mxu0 %v588
    %590 = vmatprep.subr.mxu0 0.0
    %591 = vmatpush2.xpose.msra.mxu0 0.0
    %592 = vmatprep.subr.mxu0 0.0
    %593 = vmatpush2.xpose.msra.mxu0 0.0
    %594 = vmatprep.subr.mxu0 0.0
    %595 = vmatpush2.xpose.msra.mxu0 0.0
    %596 = vmatprep.subr.mxu0 0.0
    %597 = vmatpush2.xpose.msra.mxu0 0.0
    %598 = vmatprep.subr.mxu0 0.0
    %599 = vmatpush2.xpose.msra.mxu0 0.0
    %600 = vmatprep.subr.mxu0 0.0
    %601 = vmatpush2.xpose.msra.mxu0 0.0
    %602 = vmatprep.subr.mxu0 0.0
    %603 = vmatpush2.xpose.msra.mxu0 0.0
    %604 = vmatprep.subr.mxu0 0.0
    %605 = vmatpush2.xpose.msra.mxu0 0.0
    %606 = vmatprep.subr.mxu0 0.0
    %607 = vmatpush2.xpose.msra.mxu0 0.0
    %608 = vmatprep.subr.mxu0 0.0
    %609 = vmatpush2.xpose.msra.mxu0 0.0
    %610 = vmatprep.subr.mxu0 0.0
    %611 = vmatpush2.xpose.msra.mxu0 0.0
    %612 = vmatprep.subr.mxu0 0.0
    %613 = vmatpush2.xpose.msra.mxu0 0.0
    %614 = vmatprep.subr.mxu0 0.0
    %615 = vmatpush2.xpose.msra.mxu0 0.0
    %616 = vmatprep.subr.mxu0 0.0
    %617 = vmatpush2.xpose.msra.mxu0 0.0
    %618 = vmatprep.subr.mxu0 0.0
    %619 = vmatpush2.xpose.msra.mxu0 0.0
    %620 = vmatprep.subr.mxu0 0.0
    %621 = vmatpush2.xpose.msra.mxu0 0.0
    %622 = vmatprep.mubr.f32.mxu0 0.0
    %v623 = vand.u32 %v68, 4294901760
    %v624 = vsub.f32 %v68, %v623
    %v625 = vand.u32 %v624, 4294901760
    %626 = vmatmul.mubr.f32.gmra.mxu0 %v625
    %v627 = vpop.f32.mrf.mxu0
    %v628 = vadd.f32 %v518, %v627
    %v629 = vpop.f32.mrf.mxu0
    %630 = vmatprep.mubr.f32.mxu0 0.0
    %v631 = vand.u32 %v71, 4294901760
    %v632 = vsub.f32 %v71, %v631
    %v633 = vand.u32 %v632, 4294901760
    %634 = vmatmul.mubr.f32.gmra.mxu0 %v633
    %v635 = vpop.f32.mrf.mxu0
    %v636 = vadd.f32 %v525, %v635
    %v637 = vpop.f32.mrf.mxu0
    %638 = vmatprep.mubr.f32.mxu0 0.0
    %v639 = vand.u32 %v74, 4294901760
    %v640 = vsub.f32 %v74, %v639
    %v641 = vand.u32 %v640, 4294901760
    %642 = vmatmul.mubr.f32.gmra.mxu0 %v641
    %v643 = vpop.f32.mrf.mxu0
    %v644 = vadd.f32 %v532, %v643
    %v645 = vpop.f32.mrf.mxu0
    %646 = vmatprep.mubr.f32.mxu0 0.0
    %v647 = vand.u32 %v77, 4294901760
    %v648 = vsub.f32 %v77, %v647
    %v649 = vand.u32 %v648, 4294901760
    %650 = vmatmul.mubr.f32.gmra.mxu0 %v649
    %v651 = vpop.f32.mrf.mxu0
    %v652 = vadd.f32 %v539, %v651
    %v653 = vpop.f32.mrf.mxu0
    %654 = vdwg.mxu0
    %655 = vmatprep.subr.mxu0 0.0
    %v656 = vand.u32 %v125, 4294901760
    %v657 = vsub.f32 %v125, %v656
    %v658 = vand.u32 %v657, 4294901760
    %659 = vmatpush1.xpose.msra.mxu0 %v658
    %660 = vmatprep.subr.mxu0 0.0
    %v661 = vand.u32 %v122, 4294901760
    %v662 = vsub.f32 %v122, %v661
    %v663 = vand.u32 %v662, 4294901760
    %664 = vmatpush1.xpose.msra.mxu0 %v663
    %665 = vmatprep.subr.mxu0 0.0
    %v666 = vand.u32 %v119, 4294901760
    %v667 = vsub.f32 %v119, %v666
    %v668 = vand.u32 %v667, 4294901760
    %669 = vmatpush1.xpose.msra.mxu0 %v668
    %670 = vmatprep.subr.mxu0 0.0
    %v671 = vand.u32 %v116, 4294901760
    %v672 = vsub.f32 %v116, %v671
    %v673 = vand.u32 %v672, 4294901760
    %674 = vmatpush1.xpose.msra.mxu0 %v673
    %675 = vmatprep.subr.mxu0 0.0
    %v676 = vand.u32 %v113, 4294901760
    %v677 = vsub.f32 %v113, %v676
    %v678 = vand.u32 %v677, 4294901760
    %679 = vmatpush1.xpose.msra.mxu0 %v678
    %680 = vmatprep.subr.mxu0 0.0
    %v681 = vand.u32 %v110, 4294901760
    %v682 = vsub.f32 %v110, %v681
    %v683 = vand.u32 %v682, 4294901760
    %684 = vmatpush1.xpose.msra.mxu0 %v683
    %685 = vmatprep.subr.mxu0 0.0
    %v686 = vand.u32 %v107, 4294901760
    %v687 = vsub.f32 %v107, %v686
    %v688 = vand.u32 %v687, 4294901760
    %689 = vmatpush1.xpose.msra.mxu0 %v688
    %690 = vmatprep.subr.mxu0 0.0
    %v691 = vand.u32 %v104, 4294901760
    %v692 = vsub.f32 %v104, %v691
    %v693 = vand.u32 %v692, 4294901760
    %694 = vmatpush1.xpose.msra.mxu0 %v693
    %695 = vmatprep.subr.mxu0 0.0
    %v696 = vand.u32 %v101, 4294901760
    %v697 = vsub.f32 %v101, %v696
    %v698 = vand.u32 %v697, 4294901760
    %699 = vmatpush1.xpose.msra.mxu0 %v698
    %700 = vmatprep.subr.mxu0 0.0
    %v701 = vand.u32 %v98, 4294901760
    %v702 = vsub.f32 %v98, %v701
    %v703 = vand.u32 %v702, 4294901760
    %704 = vmatpush1.xpose.msra.mxu0 %v703
    %705 = vmatprep.subr.mxu0 0.0
    %v706 = vand.u32 %v95, 4294901760
    %v707 = vsub.f32 %v95, %v706
    %v708 = vand.u32 %v707, 4294901760
    %709 = vmatpush1.xpose.msra.mxu0 %v708
    %710 = vmatprep.subr.mxu0 0.0
    %v711 = vand.u32 %v92, 4294901760
    %v712 = vsub.f32 %v92, %v711
    %v713 = vand.u32 %v712, 4294901760
    %714 = vmatpush1.xpose.msra.mxu0 %v713
    %715 = vmatprep.subr.mxu0 0.0
    %v716 = vand.u32 %v89, 4294901760
    %v717 = vsub.f32 %v89, %v716
    %v718 = vand.u32 %v717, 4294901760
    %719 = vmatpush1.xpose.msra.mxu0 %v718
    %720 = vmatprep.subr.mxu0 0.0
    %v721 = vand.u32 %v86, 4294901760
    %v722 = vsub.f32 %v86, %v721
    %v723 = vand.u32 %v722, 4294901760
    %724 = vmatpush1.xpose.msra.mxu0 %v723
    %725 = vmatprep.subr.mxu0 0.0
    %v726 = vand.u32 %v83, 4294901760
    %v727 = vsub.f32 %v83, %v726
    %v728 = vand.u32 %v727, 4294901760
    %729 = vmatpush1.xpose.msra.mxu0 %v728
    %730 = vmatprep.subr.mxu0 0.0
    %v731 = vand.u32 %v80, 4294901760
    %v732 = vsub.f32 %v80, %v731
    %v733 = vand.u32 %v732, 4294901760
    %734 = vmatpush1.xpose.msra.mxu0 %v733
    %735 = vmatprep.subr.mxu0 0.0
    %736 = vmatpush2.xpose.msra.mxu0 0.0
    %737 = vmatprep.subr.mxu0 0.0
    %738 = vmatpush2.xpose.msra.mxu0 0.0
    %739 = vmatprep.subr.mxu0 0.0
    %740 = vmatpush2.xpose.msra.mxu0 0.0
    %741 = vmatprep.subr.mxu0 0.0
    %742 = vmatpush2.xpose.msra.mxu0 0.0
    %743 = vmatprep.subr.mxu0 0.0
    %744 = vmatpush2.xpose.msra.mxu0 0.0
    %745 = vmatprep.subr.mxu0 0.0
    %746 = vmatpush2.xpose.msra.mxu0 0.0
    %747 = vmatprep.subr.mxu0 0.0
    %748 = vmatpush2.xpose.msra.mxu0 0.0
    %749 = vmatprep.subr.mxu0 0.0
    %750 = vmatpush2.xpose.msra.mxu0 0.0
    %751 = vmatprep.subr.mxu0 0.0
    %752 = vmatpush2.xpose.msra.mxu0 0.0
    %753 = vmatprep.subr.mxu0 0.0
    %754 = vmatpush2.xpose.msra.mxu0 0.0
    %755 = vmatprep.subr.mxu0 0.0
    %756 = vmatpush2.xpose.msra.mxu0 0.0
    %757 = vmatprep.subr.mxu0 0.0
    %758 = vmatpush2.xpose.msra.mxu0 0.0
    %759 = vmatprep.subr.mxu0 0.0
    %760 = vmatpush2.xpose.msra.mxu0 0.0
    %761 = vmatprep.subr.mxu0 0.0
    %762 = vmatpush2.xpose.msra.mxu0 0.0
    %763 = vmatprep.subr.mxu0 0.0
    %764 = vmatpush2.xpose.msra.mxu0 0.0
    %765 = vmatprep.subr.mxu0 0.0
    %766 = vmatpush2.xpose.msra.mxu0 0.0
    %767 = vmatprep.mubr.f32.mxu0 0.0
    %v768 = vand.u32 %v68, 4294901760
    %769 = vmatmul.mubr.f32.gmra.mxu0 %v768
    %v770 = vpop.f32.mrf.mxu0
    %v771 = vadd.f32 %v628, %v770
    %v772 = vpop.f32.mrf.mxu0
    %773 = vmatprep.mubr.f32.mxu0 0.0
    %v774 = vand.u32 %v71, 4294901760
    %775 = vmatmul.mubr.f32.gmra.mxu0 %v774
    %v776 = vpop.f32.mrf.mxu0
    %v777 = vadd.f32 %v636, %v776
    %v778 = vpop.f32.mrf.mxu0
    %779 = vmatprep.mubr.f32.mxu0 0.0
    %v780 = vand.u32 %v74, 4294901760
    %781 = vmatmul.mubr.f32.gmra.mxu0 %v780
    %v782 = vpop.f32.mrf.mxu0
    %v783 = vadd.f32 %v644, %v782
    %v784 = vpop.f32.mrf.mxu0
    %785 = vmatprep.mubr.f32.mxu0 0.0
    %v786 = vand.u32 %v77, 4294901760
    %787 = vmatmul.mubr.f32.gmra.mxu0 %v786
    %v788 = vpop.f32.mrf.mxu0
    %v789 = vadd.f32 %v652, %v788
    %v790 = vpop.f32.mrf.mxu0
    %791 = vdwg.mxu0
    %792 = vmatprep.subr.mxu0 0.0
    %v793 = vand.u32 %v125, 4294901760
    %794 = vmatpush1.xpose.msra.mxu0 %v793
    %795 = vmatprep.subr.mxu0 0.0
    %v796 = vand.u32 %v122, 4294901760
    %797 = vmatpush1.xpose.msra.mxu0 %v796
    %798 = vmatprep.subr.mxu0 0.0
    %v799 = vand.u32 %v119, 4294901760
    %800 = vmatpush1.xpose.msra.mxu0 %v799
    %801 = vmatprep.subr.mxu0 0.0
    %v802 = vand.u32 %v116, 4294901760
    %803 = vmatpush1.xpose.msra.mxu0 %v802
    %804 = vmatprep.subr.mxu0 0.0
    %v805 = vand.u32 %v113, 4294901760
    %806 = vmatpush1.xpose.msra.mxu0 %v805
    %807 = vmatprep.subr.mxu0 0.0
    %v808 = vand.u32 %v110, 4294901760
    %809 = vmatpush1.xpose.msra.mxu0 %v808
    %810 = vmatprep.subr.mxu0 0.0
    %v811 = vand.u32 %v107, 4294901760
    %812 = vmatpush1.xpose.msra.mxu0 %v811
    %813 = vmatprep.subr.mxu0 0.0
    %v814 = vand.u32 %v104, 4294901760
    %815 = vmatpush1.xpose.msra.mxu0 %v814
    %816 = vmatprep.subr.mxu0 0.0
    %v817 = vand.u32 %v101, 4294901760
    %818 = vmatpush1.xpose.msra.mxu0 %v817
    %819 = vmatprep.subr.mxu0 0.0
    %v820 = vand.u32 %v98, 4294901760
    %821 = vmatpush1.xpose.msra.mxu0 %v820
    %822 = vmatprep.subr.mxu0 0.0
    %v823 = vand.u32 %v95, 4294901760
    %824 = vmatpush1.xpose.msra.mxu0 %v823
    %825 = vmatprep.subr.mxu0 0.0
    %v826 = vand.u32 %v92, 4294901760
    %827 = vmatpush1.xpose.msra.mxu0 %v826
    %828 = vmatprep.subr.mxu0 0.0
    %v829 = vand.u32 %v89, 4294901760
    %830 = vmatpush1.xpose.msra.mxu0 %v829
    %831 = vmatprep.subr.mxu0 0.0
    %v832 = vand.u32 %v86, 4294901760
    %833 = vmatpush1.xpose.msra.mxu0 %v832
    %834 = vmatprep.subr.mxu0 0.0
    %v835 = vand.u32 %v83, 4294901760
    %836 = vmatpush1.xpose.msra.mxu0 %v835
    %837 = vmatprep.subr.mxu0 0.0
    %v838 = vand.u32 %v80, 4294901760
    %839 = vmatpush1.xpose.msra.mxu0 %v838
    %840 = vmatprep.subr.mxu0 0.0
    %841 = vmatpush2.xpose.msra.mxu0 0.0
    %842 = vmatprep.subr.mxu0 0.0
    %843 = vmatpush2.xpose.msra.mxu0 0.0
    %844 = vmatprep.subr.mxu0 0.0
    %845 = vmatpush2.xpose.msra.mxu0 0.0
    %846 = vmatprep.subr.mxu0 0.0
    %847 = vmatpush2.xpose.msra.mxu0 0.0
    %848 = vmatprep.subr.mxu0 0.0
    %849 = vmatpush2.xpose.msra.mxu0 0.0
    %850 = vmatprep.subr.mxu0 0.0
    %851 = vmatpush2.xpose.msra.mxu0 0.0
    %852 = vmatprep.subr.mxu0 0.0
    %853 = vmatpush2.xpose.msra.mxu0 0.0
    %854 = vmatprep.subr.mxu0 0.0
    %855 = vmatpush2.xpose.msra.mxu0 0.0
    %856 = vmatprep.subr.mxu0 0.0
    %857 = vmatpush2.xpose.msra.mxu0 0.0
    %858 = vmatprep.subr.mxu0 0.0
    %859 = vmatpush2.xpose.msra.mxu0 0.0
    %860 = vmatprep.subr.mxu0 0.0
    %861 = vmatpush2.xpose.msra.mxu0 0.0
    %862 = vmatprep.subr.mxu0 0.0
    %863 = vmatpush2.xpose.msra.mxu0 0.0
    %864 = vmatprep.subr.mxu0 0.0
    %865 = vmatpush2.xpose.msra.mxu0 0.0
    %866 = vmatprep.subr.mxu0 0.0
    %867 = vmatpush2.xpose.msra.mxu0 0.0
    %868 = vmatprep.subr.mxu0 0.0
    %869 = vmatpush2.xpose.msra.mxu0 0.0
    %870 = vmatprep.subr.mxu0 0.0
    %871 = vmatpush2.xpose.msra.mxu0 0.0
    %872 = vmatprep.mubr.f32.mxu0 0.0
    %v873 = vand.u32 %v68, 4294901760
    %874 = vmatmul.mubr.f32.gmra.mxu0 %v873
    %v875 = vpop.f32.mrf.mxu0
    %v876 = vadd.f32 %v771, %v875
    %v877 = vpop.f32.mrf.mxu0
    %878 = vmatprep.mubr.f32.mxu0 0.0
    %v879 = vand.u32 %v71, 4294901760
    %880 = vmatmul.mubr.f32.gmra.mxu0 %v879
    %v881 = vpop.f32.mrf.mxu0
    %v882 = vadd.f32 %v777, %v881
    %v883 = vpop.f32.mrf.mxu0
    %884 = vmatprep.mubr.f32.mxu0 0.0
    %v885 = vand.u32 %v74, 4294901760
    %886 = vmatmul.mubr.f32.gmra.mxu0 %v885
    %v887 = vpop.f32.mrf.mxu0
    %v888 = vadd.f32 %v783, %v887
    %v889 = vpop.f32.mrf.mxu0
    %890 = vmatprep.mubr.f32.mxu0 0.0
    %v891 = vand.u32 %v77, 4294901760
    %892 = vmatmul.mubr.f32.gmra.mxu0 %v891
    %v893 = vpop.f32.mrf.mxu0
    %v894 = vadd.f32 %v789, %v893
    %v895 = vpop.f32.mrf.mxu0
    %896 = vdwg.mxu0
    %v897 = vtanh.pop %v876
    %v898 = vtanh.pop %v882
    %v899 = vtanh.pop %v888
    %v900 = vtanh.pop %v894
    %v901 = vld [vmem:[%s2] sm:$0xff]
    %v902 = vld [vmem:[%s2 + $0x8] sm:$0xff]
    %v903 = vld [vmem:[%s2 + $0x10] sm:$0xff]
    %v904 = vld [vmem:[%s2 + $0x18] sm:$0xff]
    %905 = vset.pattern.permute.xlu0 1
    %906 = vperm.xlu0 %905, %v42
    %v907 = vpop.permute.xlu0 %906
    %909 = vset.pattern.permute.xlu0 1
    %910 = vperm.xlu0 %909, %v43
    %v911 = vpop.permute.xlu0 %910
    %913 = vset.pattern.permute.xlu0 1
    %914 = vperm.xlu0 %913, %v44
    %v915 = vpop.permute.xlu0 %914
    %917 = vset.pattern.permute.xlu0 1
    %918 = vperm.xlu0 %917, %v45
    %v919 = vpop.permute.xlu0 %918
    %vm921 = vcmask 261120
    %v923 = vsel %vm921, %v901, 0
    %v926 = vsel %vm921, %v902, 0
    %v929 = vsel %vm921, %v903, 0
    %v932 = vsel %vm921, %v904, 0
    %934 = vmatprep.subr.mxu0 0.0
    %935 = vmatpush1.msra.mxu0 0.0
    %936 = vmatprep.subr.mxu0 0.0
    %937 = vmatpush1.msra.mxu0 0.0
    %938 = vmatprep.subr.mxu0 0.0
    %939 = vmatpush1.msra.mxu0 0.0
    %940 = vmatprep.subr.mxu0 0.0
    %941 = vmatpush1.msra.mxu0 0.0
    %942 = vmatprep.subr.mxu0 0.0
    %943 = vmatpush1.msra.mxu0 0.0
    %944 = vmatprep.subr.mxu0 0.0
    %945 = vmatpush1.msra.mxu0 0.0
    %946 = vmatprep.subr.mxu0 0.0
    %947 = vmatpush1.msra.mxu0 0.0
    %948 = vmatprep.subr.mxu0 0.0
    %949 = vmatpush1.msra.mxu0 0.0
    %950 = vmatprep.subr.mxu0 0.0
    %951 = vmatpush1.msra.mxu0 0.0
    %952 = vmatprep.subr.mxu0 0.0
    %953 = vmatpush1.msra.mxu0 0.0
    %954 = vmatprep.subr.mxu0 0.0
    %955 = vmatpush1.msra.mxu0 0.0
    %956 = vmatprep.subr.mxu0 0.0
    %957 = vmatpush1.msra.mxu0 0.0
    %958 = vmatprep.subr.mxu0 0.0
    %v959 = vand.u32 %v900, 4294901760
    %960 = vmatpush1.msra.mxu0 %v959
    %961 = vmatprep.subr.mxu0 0.0
    %v962 = vand.u32 %v899, 4294901760
    %963 = vmatpush1.msra.mxu0 %v962
    %964 = vmatprep.subr.mxu0 0.0
    %v965 = vand.u32 %v898, 4294901760
    %966 = vmatpush1.msra.mxu0 %v965
    %967 = vmatprep.subr.mxu0 0.0
    %v968 = vand.u32 %v897, 4294901760
    %969 = vmatpush1.msra.mxu0 %v968
    %970 = vmatprep.subr.mxu0 0.0
    %971 = vmatpush2.msra.mxu0 0.0
    %972 = vmatprep.subr.mxu0 0.0
    %973 = vmatpush2.msra.mxu0 0.0
    %974 = vmatprep.subr.mxu0 0.0
    %975 = vmatpush2.msra.mxu0 0.0
    %976 = vmatprep.subr.mxu0 0.0
    %977 = vmatpush2.msra.mxu0 0.0
    %978 = vmatprep.subr.mxu0 0.0
    %979 = vmatpush2.msra.mxu0 0.0
    %980 = vmatprep.subr.mxu0 0.0
    %981 = vmatpush2.msra.mxu0 0.0
    %982 = vmatprep.subr.mxu0 0.0
    %983 = vmatpush2.msra.mxu0 0.0
    %984 = vmatprep.subr.mxu0 0.0
    %985 = vmatpush2.msra.mxu0 0.0
    %986 = vmatprep.subr.mxu0 0.0
    %987 = vmatpush2.msra.mxu0 0.0
    %988 = vmatprep.subr.mxu0 0.0
    %989 = vmatpush2.msra.mxu0 0.0
    %990 = vmatprep.subr.mxu0 0.0
    %991 = vmatpush2.msra.mxu0 0.0
    %992 = vmatprep.subr.mxu0 0.0
    %993 = vmatpush2.msra.mxu0 0.0
    %994 = vmatprep.subr.mxu0 0.0
    %995 = vmatpush2.msra.mxu0 0.0
    %996 = vmatprep.subr.mxu0 0.0
    %997 = vmatpush2.msra.mxu0 0.0
    %998 = vmatprep.subr.mxu0 0.0
    %999 = vmatpush2.msra.mxu0 0.0
    %1000 = vmatprep.subr.mxu0 0.0
    %1001 = vmatpush2.msra.mxu0 0.0
    %1002 = vmatprep.mubr.f32.mxu0 0.0
    %v1003 = vand.u32 %v923, 4294901760
    %v1004 = vsub.f32 %v923, %v1003
    %v1005 = vand.u32 %v1004, 4294901760
    %v1006 = vsub.f32 %v1004, %v1005
    %v1007 = vand.u32 %v1006, 4294901760
    %1008 = vmatmul.mubr.f32.gmra.mxu0 %v1007
    %v1009 = vpop.f32.mrf.mxu0
    %v1010 = vadd.f32 %v907, %v1009
    %v1011 = vpop.f32.mrf.mxu0
    %1012 = vmatprep.mubr.f32.mxu0 0.0
    %v1013 = vand.u32 %v926, 4294901760
    %v1014 = vsub.f32 %v926, %v1013
    %v1015 = vand.u32 %v1014, 4294901760
    %v1016 = vsub.f32 %v1014, %v1015
    %v1017 = vand.u32 %v1016, 4294901760
    %1018 = vmatmul.mubr.f32.gmra.mxu0 %v1017
    %v1019 = vpop.f32.mrf.mxu0
    %v1020 = vadd.f32 %v911, %v1019
    %v1021 = vpop.f32.mrf.mxu0
    %1022 = vmatprep.mubr.f32.mxu0 0.0
    %v1023 = vand.u32 %v929, 4294901760
    %v1024 = vsub.f32 %v929, %v1023
    %v1025 = vand.u32 %v1024, 4294901760
    %v1026 = vsub.f32 %v1024, %v1025
    %v1027 = vand.u32 %v1026, 4294901760
    %1028 = vmatmul.mubr.f32.gmra.mxu0 %v1027
    %v1029 = vpop.f32.mrf.mxu0
    %v1030 = vadd.f32 %v915, %v1029
    %v1031 = vpop.f32.mrf.mxu0
    %1032 = vmatprep.mubr.f32.mxu0 0.0
    %v1033 = vand.u32 %v932, 4294901760
    %v1034 = vsub.f32 %v932, %v1033
    %v1035 = vand.u32 %v1034, 4294901760
    %v1036 = vsub.f32 %v1034, %v1035
    %v1037 = vand.u32 %v1036, 4294901760
    %1038 = vmatmul.mubr.f32.gmra.mxu0 %v1037
    %v1039 = vpop.f32.mrf.mxu0
    %v1040 = vadd.f32 %v919, %v1039
    %v1041 = vpop.f32.mrf.mxu0
    %1042 = vdwg.mxu0
    %1043 = vmatprep.subr.mxu0 0.0
    %1044 = vmatpush1.msra.mxu0 0.0
    %1045 = vmatprep.subr.mxu0 0.0
    %1046 = vmatpush1.msra.mxu0 0.0
    %1047 = vmatprep.subr.mxu0 0.0
    %1048 = vmatpush1.msra.mxu0 0.0
    %1049 = vmatprep.subr.mxu0 0.0
    %1050 = vmatpush1.msra.mxu0 0.0
    %1051 = vmatprep.subr.mxu0 0.0
    %1052 = vmatpush1.msra.mxu0 0.0
    %1053 = vmatprep.subr.mxu0 0.0
    %1054 = vmatpush1.msra.mxu0 0.0
    %1055 = vmatprep.subr.mxu0 0.0
    %1056 = vmatpush1.msra.mxu0 0.0
    %1057 = vmatprep.subr.mxu0 0.0
    %1058 = vmatpush1.msra.mxu0 0.0
    %1059 = vmatprep.subr.mxu0 0.0
    %1060 = vmatpush1.msra.mxu0 0.0
    %1061 = vmatprep.subr.mxu0 0.0
    %1062 = vmatpush1.msra.mxu0 0.0
    %1063 = vmatprep.subr.mxu0 0.0
    %1064 = vmatpush1.msra.mxu0 0.0
    %1065 = vmatprep.subr.mxu0 0.0
    %1066 = vmatpush1.msra.mxu0 0.0
    %1067 = vmatprep.subr.mxu0 0.0
    %v1068 = vand.u32 %v900, 4294901760
    %v1069 = vsub.f32 %v900, %v1068
    %v1070 = vand.u32 %v1069, 4294901760
    %v1071 = vsub.f32 %v1069, %v1070
    %v1072 = vand.u32 %v1071, 4294901760
    %1073 = vmatpush1.msra.mxu0 %v1072
    %1074 = vmatprep.subr.mxu0 0.0
    %v1075 = vand.u32 %v899, 4294901760
    %v1076 = vsub.f32 %v899, %v1075
    %v1077 = vand.u32 %v1076, 4294901760
    %v1078 = vsub.f32 %v1076, %v1077
    %v1079 = vand.u32 %v1078, 4294901760
    %1080 = vmatpush1.msra.mxu0 %v1079
    %1081 = vmatprep.subr.mxu0 0.0
    %v1082 = vand.u32 %v898, 4294901760
    %v1083 = vsub.f32 %v898, %v1082
    %v1084 = vand.u32 %v1083, 4294901760
    %v1085 = vsub.f32 %v1083, %v1084
    %v1086 = vand.u32 %v1085, 4294901760
    %1087 = vmatpush1.msra.mxu0 %v1086
    %1088 = vmatprep.subr.mxu0 0.0
    %v1089 = vand.u32 %v897, 4294901760
    %v1090 = vsub.f32 %v897, %v1089
    %v1091 = vand.u32 %v1090, 4294901760
    %v1092 = vsub.f32 %v1090, %v1091
    %v1093 = vand.u32 %v1092, 4294901760
    %1094 = vmatpush1.msra.mxu0 %v1093
    %1095 = vmatprep.subr.mxu0 0.0
    %1096 = vmatpush2.msra.mxu0 0.0
    %1097 = vmatprep.subr.mxu0 0.0
    %1098 = vmatpush2.msra.mxu0 0.0
    %1099 = vmatprep.subr.mxu0 0.0
    %1100 = vmatpush2.msra.mxu0 0.0
    %1101 = vmatprep.subr.mxu0 0.0
    %1102 = vmatpush2.msra.mxu0 0.0
    %1103 = vmatprep.subr.mxu0 0.0
    %1104 = vmatpush2.msra.mxu0 0.0
    %1105 = vmatprep.subr.mxu0 0.0
    %1106 = vmatpush2.msra.mxu0 0.0
    %1107 = vmatprep.subr.mxu0 0.0
    %1108 = vmatpush2.msra.mxu0 0.0
    %1109 = vmatprep.subr.mxu0 0.0
    %1110 = vmatpush2.msra.mxu0 0.0
    %1111 = vmatprep.subr.mxu0 0.0
    %1112 = vmatpush2.msra.mxu0 0.0
    %1113 = vmatprep.subr.mxu0 0.0
    %1114 = vmatpush2.msra.mxu0 0.0
    %1115 = vmatprep.subr.mxu0 0.0
    %1116 = vmatpush2.msra.mxu0 0.0
    %1117 = vmatprep.subr.mxu0 0.0
    %1118 = vmatpush2.msra.mxu0 0.0
    %1119 = vmatprep.subr.mxu0 0.0
    %1120 = vmatpush2.msra.mxu0 0.0
    %1121 = vmatprep.subr.mxu0 0.0
    %1122 = vmatpush2.msra.mxu0 0.0
    %1123 = vmatprep.subr.mxu0 0.0
    %1124 = vmatpush2.msra.mxu0 0.0
    %1125 = vmatprep.subr.mxu0 0.0
    %1126 = vmatpush2.msra.mxu0 0.0
    %1127 = vmatprep.mubr.f32.mxu0 0.0
    %v1128 = vand.u32 %v923, 4294901760
    %1129 = vmatmul.mubr.f32.gmra.mxu0 %v1128
    %v1130 = vpop.f32.mrf.mxu0
    %v1131 = vadd.f32 %v1010, %v1130
    %v1132 = vpop.f32.mrf.mxu0
    %1133 = vmatprep.mubr.f32.mxu0 0.0
    %v1134 = vand.u32 %v926, 4294901760
    %1135 = vmatmul.mubr.f32.gmra.mxu0 %v1134
    %v1136 = vpop.f32.mrf.mxu0
    %v1137 = vadd.f32 %v1020, %v1136
    %v1138 = vpop.f32.mrf.mxu0
    %1139 = vmatprep.mubr.f32.mxu0 0.0
    %v1140 = vand.u32 %v929, 4294901760
    %1141 = vmatmul.mubr.f32.gmra.mxu0 %v1140
    %v1142 = vpop.f32.mrf.mxu0
    %v1143 = vadd.f32 %v1030, %v1142
    %v1144 = vpop.f32.mrf.mxu0
    %1145 = vmatprep.mubr.f32.mxu0 0.0
    %v1146 = vand.u32 %v932, 4294901760
    %1147 = vmatmul.mubr.f32.gmra.mxu0 %v1146
    %v1148 = vpop.f32.mrf.mxu0
    %v1149 = vadd.f32 %v1040, %v1148
    %v1150 = vpop.f32.mrf.mxu0
    %1151 = vdwg.mxu0
    %1152 = vmatprep.subr.mxu0 0.0
    %1153 = vmatpush1.msra.mxu0 0.0
    %1154 = vmatprep.subr.mxu0 0.0
    %1155 = vmatpush1.msra.mxu0 0.0
    %1156 = vmatprep.subr.mxu0 0.0
    %1157 = vmatpush1.msra.mxu0 0.0
    %1158 = vmatprep.subr.mxu0 0.0
    %1159 = vmatpush1.msra.mxu0 0.0
    %1160 = vmatprep.subr.mxu0 0.0
    %1161 = vmatpush1.msra.mxu0 0.0
    %1162 = vmatprep.subr.mxu0 0.0
    %1163 = vmatpush1.msra.mxu0 0.0
    %1164 = vmatprep.subr.mxu0 0.0
    %1165 = vmatpush1.msra.mxu0 0.0
    %1166 = vmatprep.subr.mxu0 0.0
    %1167 = vmatpush1.msra.mxu0 0.0
    %1168 = vmatprep.subr.mxu0 0.0
    %1169 = vmatpush1.msra.mxu0 0.0
    %1170 = vmatprep.subr.mxu0 0.0
    %1171 = vmatpush1.msra.mxu0 0.0
    %1172 = vmatprep.subr.mxu0 0.0
    %1173 = vmatpush1.msra.mxu0 0.0
    %1174 = vmatprep.subr.mxu0 0.0
    %1175 = vmatpush1.msra.mxu0 0.0
    %1176 = vmatprep.subr.mxu0 0.0
    %v1177 = vand.u32 %v900, 4294901760
    %v1178 = vsub.f32 %v900, %v1177
    %1179 = vmatpush1.msra.mxu0 %v1178
    %1180 = vmatprep.subr.mxu0 0.0
    %v1181 = vand.u32 %v899, 4294901760
    %v1182 = vsub.f32 %v899, %v1181
    %1183 = vmatpush1.msra.mxu0 %v1182
    %1184 = vmatprep.subr.mxu0 0.0
    %v1185 = vand.u32 %v898, 4294901760
    %v1186 = vsub.f32 %v898, %v1185
    %1187 = vmatpush1.msra.mxu0 %v1186
    %1188 = vmatprep.subr.mxu0 0.0
    %v1189 = vand.u32 %v897, 4294901760
    %v1190 = vsub.f32 %v897, %v1189
    %1191 = vmatpush1.msra.mxu0 %v1190
    %1192 = vmatprep.subr.mxu0 0.0
    %1193 = vmatpush2.msra.mxu0 0.0
    %1194 = vmatprep.subr.mxu0 0.0
    %1195 = vmatpush2.msra.mxu0 0.0
    %1196 = vmatprep.subr.mxu0 0.0
    %1197 = vmatpush2.msra.mxu0 0.0
    %1198 = vmatprep.subr.mxu0 0.0
    %1199 = vmatpush2.msra.mxu0 0.0
    %1200 = vmatprep.subr.mxu0 0.0
    %1201 = vmatpush2.msra.mxu0 0.0
    %1202 = vmatprep.subr.mxu0 0.0
    %1203 = vmatpush2.msra.mxu0 0.0
    %1204 = vmatprep.subr.mxu0 0.0
    %1205 = vmatpush2.msra.mxu0 0.0
    %1206 = vmatprep.subr.mxu0 0.0
    %1207 = vmatpush2.msra.mxu0 0.0
    %1208 = vmatprep.subr.mxu0 0.0
    %1209 = vmatpush2.msra.mxu0 0.0
    %1210 = vmatprep.subr.mxu0 0.0
    %1211 = vmatpush2.msra.mxu0 0.0
    %1212 = vmatprep.subr.mxu0 0.0
    %1213 = vmatpush2.msra.mxu0 0.0
    %1214 = vmatprep.subr.mxu0 0.0
    %1215 = vmatpush2.msra.mxu0 0.0
    %1216 = vmatprep.subr.mxu0 0.0
    %1217 = vmatpush2.msra.mxu0 0.0
    %1218 = vmatprep.subr.mxu0 0.0
    %1219 = vmatpush2.msra.mxu0 0.0
    %1220 = vmatprep.subr.mxu0 0.0
    %1221 = vmatpush2.msra.mxu0 0.0
    %1222 = vmatprep.subr.mxu0 0.0
    %1223 = vmatpush2.msra.mxu0 0.0
    %1224 = vmatprep.mubr.f32.mxu0 0.0
    %v1225 = vand.u32 %v923, 4294901760
    %v1226 = vsub.f32 %v923, %v1225
    %1227 = vmatmul.mubr.f32.gmra.mxu0 %v1226
    %v1228 = vpop.f32.mrf.mxu0
    %v1229 = vadd.f32 %v1131, %v1228
    %v1230 = vpop.f32.mrf.mxu0
    %1231 = vmatprep.mubr.f32.mxu0 0.0
    %v1232 = vand.u32 %v926, 4294901760
    %v1233 = vsub.f32 %v926, %v1232
    %1234 = vmatmul.mubr.f32.gmra.mxu0 %v1233
    %v1235 = vpop.f32.mrf.mxu0
    %v1236 = vadd.f32 %v1137, %v1235
    %v1237 = vpop.f32.mrf.mxu0
    %1238 = vmatprep.mubr.f32.mxu0 0.0
    %v1239 = vand.u32 %v929, 4294901760
    %v1240 = vsub.f32 %v929, %v1239
    %1241 = vmatmul.mubr.f32.gmra.mxu0 %v1240
    %v1242 = vpop.f32.mrf.mxu0
    %v1243 = vadd.f32 %v1143, %v1242
    %v1244 = vpop.f32.mrf.mxu0
    %1245 = vmatprep.mubr.f32.mxu0 0.0
    %v1246 = vand.u32 %v932, 4294901760
    %v1247 = vsub.f32 %v932, %v1246
    %1248 = vmatmul.mubr.f32.gmra.mxu0 %v1247
    %v1249 = vpop.f32.mrf.mxu0
    %v1250 = vadd.f32 %v1149, %v1249
    %v1251 = vpop.f32.mrf.mxu0
    %1252 = vdwg.mxu0
    %1253 = vmatprep.subr.mxu0 0.0
    %1254 = vmatpush1.msra.mxu0 0.0
    %1255 = vmatprep.subr.mxu0 0.0
    %1256 = vmatpush1.msra.mxu0 0.0
    %1257 = vmatprep.subr.mxu0 0.0
    %1258 = vmatpush1.msra.mxu0 0.0
    %1259 = vmatprep.subr.mxu0 0.0
    %1260 = vmatpush1.msra.mxu0 0.0
    %1261 = vmatprep.subr.mxu0 0.0
    %1262 = vmatpush1.msra.mxu0 0.0
    %1263 = vmatprep.subr.mxu0 0.0
    %1264 = vmatpush1.msra.mxu0 0.0
    %1265 = vmatprep.subr.mxu0 0.0
    %1266 = vmatpush1.msra.mxu0 0.0
    %1267 = vmatprep.subr.mxu0 0.0
    %1268 = vmatpush1.msra.mxu0 0.0
    %1269 = vmatprep.subr.mxu0 0.0
    %1270 = vmatpush1.msra.mxu0 0.0
    %1271 = vmatprep.subr.mxu0 0.0
    %1272 = vmatpush1.msra.mxu0 0.0
    %1273 = vmatprep.subr.mxu0 0.0
    %1274 = vmatpush1.msra.mxu0 0.0
    %1275 = vmatprep.subr.mxu0 0.0
    %1276 = vmatpush1.msra.mxu0 0.0
    %1277 = vmatprep.subr.mxu0 0.0
    %v1278 = vand.u32 %v900, 4294901760
    %1279 = vmatpush1.msra.mxu0 %v1278
    %1280 = vmatprep.subr.mxu0 0.0
    %v1281 = vand.u32 %v899, 4294901760
    %1282 = vmatpush1.msra.mxu0 %v1281
    %1283 = vmatprep.subr.mxu0 0.0
    %v1284 = vand.u32 %v898, 4294901760
    %1285 = vmatpush1.msra.mxu0 %v1284
    %1286 = vmatprep.subr.mxu0 0.0
    %v1287 = vand.u32 %v897, 4294901760
    %1288 = vmatpush1.msra.mxu0 %v1287
    %1289 = vmatprep.subr.mxu0 0.0
    %1290 = vmatpush2.msra.mxu0 0.0
    %1291 = vmatprep.subr.mxu0 0.0
    %1292 = vmatpush2.msra.mxu0 0.0
    %1293 = vmatprep.subr.mxu0 0.0
    %1294 = vmatpush2.msra.mxu0 0.0
    %1295 = vmatprep.subr.mxu0 0.0
    %1296 = vmatpush2.msra.mxu0 0.0
    %1297 = vmatprep.subr.mxu0 0.0
    %1298 = vmatpush2.msra.mxu0 0.0
    %1299 = vmatprep.subr.mxu0 0.0
    %1300 = vmatpush2.msra.mxu0 0.0
    %1301 = vmatprep.subr.mxu0 0.0
    %1302 = vmatpush2.msra.mxu0 0.0
    %1303 = vmatprep.subr.mxu0 0.0
    %1304 = vmatpush2.msra.mxu0 0.0
    %1305 = vmatprep.subr.mxu0 0.0
    %1306 = vmatpush2.msra.mxu0 0.0
    %1307 = vmatprep.subr.mxu0 0.0
    %1308 = vmatpush2.msra.mxu0 0.0
    %1309 = vmatprep.subr.mxu0 0.0
    %1310 = vmatpush2.msra.mxu0 0.0
    %1311 = vmatprep.subr.mxu0 0.0
    %1312 = vmatpush2.msra.mxu0 0.0
    %1313 = vmatprep.subr.mxu0 0.0
    %1314 = vmatpush2.msra.mxu0 0.0
    %1315 = vmatprep.subr.mxu0 0.0
    %1316 = vmatpush2.msra.mxu0 0.0
    %1317 = vmatprep.subr.mxu0 0.0
    %1318 = vmatpush2.msra.mxu0 0.0
    %1319 = vmatprep.subr.mxu0 0.0
    %1320 = vmatpush2.msra.mxu0 0.0
    %1321 = vmatprep.mubr.f32.mxu0 0.0
    %v1322 = vand.u32 %v923, 4294901760
    %v1323 = vsub.f32 %v923, %v1322
    %v1324 = vand.u32 %v1323, 4294901760
    %1325 = vmatmul.mubr.f32.gmra.mxu0 %v1324
    %v1326 = vpop.f32.mrf.mxu0
    %v1327 = vadd.f32 %v1229, %v1326
    %v1328 = vpop.f32.mrf.mxu0
    %1329 = vmatprep.mubr.f32.mxu0 0.0
    %v1330 = vand.u32 %v926, 4294901760
    %v1331 = vsub.f32 %v926, %v1330
    %v1332 = vand.u32 %v1331, 4294901760
    %1333 = vmatmul.mubr.f32.gmra.mxu0 %v1332
    %v1334 = vpop.f32.mrf.mxu0
    %v1335 = vadd.f32 %v1236, %v1334
    %v1336 = vpop.f32.mrf.mxu0
    %1337 = vmatprep.mubr.f32.mxu0 0.0
    %v1338 = vand.u32 %v929, 4294901760
    %v1339 = vsub.f32 %v929, %v1338
    %v1340 = vand.u32 %v1339, 4294901760
    %1341 = vmatmul.mubr.f32.gmra.mxu0 %v1340
    %v1342 = vpop.f32.mrf.mxu0
    %v1343 = vadd.f32 %v1243, %v1342
    %v1344 = vpop.f32.mrf.mxu0
    %1345 = vmatprep.mubr.f32.mxu0 0.0
    %v1346 = vand.u32 %v932, 4294901760
    %v1347 = vsub.f32 %v932, %v1346
    %v1348 = vand.u32 %v1347, 4294901760
    %1349 = vmatmul.mubr.f32.gmra.mxu0 %v1348
    %v1350 = vpop.f32.mrf.mxu0
    %v1351 = vadd.f32 %v1250, %v1350
    %v1352 = vpop.f32.mrf.mxu0
    %1353 = vdwg.mxu0
    %1354 = vmatprep.subr.mxu0 0.0
    %1355 = vmatpush1.msra.mxu0 0.0
    %1356 = vmatprep.subr.mxu0 0.0
    %1357 = vmatpush1.msra.mxu0 0.0
    %1358 = vmatprep.subr.mxu0 0.0
    %1359 = vmatpush1.msra.mxu0 0.0
    %1360 = vmatprep.subr.mxu0 0.0
    %1361 = vmatpush1.msra.mxu0 0.0
    %1362 = vmatprep.subr.mxu0 0.0
    %1363 = vmatpush1.msra.mxu0 0.0
    %1364 = vmatprep.subr.mxu0 0.0
    %1365 = vmatpush1.msra.mxu0 0.0
    %1366 = vmatprep.subr.mxu0 0.0
    %1367 = vmatpush1.msra.mxu0 0.0
    %1368 = vmatprep.subr.mxu0 0.0
    %1369 = vmatpush1.msra.mxu0 0.0
    %1370 = vmatprep.subr.mxu0 0.0
    %1371 = vmatpush1.msra.mxu0 0.0
    %1372 = vmatprep.subr.mxu0 0.0
    %1373 = vmatpush1.msra.mxu0 0.0
    %1374 = vmatprep.subr.mxu0 0.0
    %1375 = vmatpush1.msra.mxu0 0.0
    %1376 = vmatprep.subr.mxu0 0.0
    %1377 = vmatpush1.msra.mxu0 0.0
    %1378 = vmatprep.subr.mxu0 0.0
    %v1379 = vand.u32 %v900, 4294901760
    %v1380 = vsub.f32 %v900, %v1379
    %v1381 = vand.u32 %v1380, 4294901760
    %1382 = vmatpush1.msra.mxu0 %v1381
    %1383 = vmatprep.subr.mxu0 0.0
    %v1384 = vand.u32 %v899, 4294901760
    %v1385 = vsub.f32 %v899, %v1384
    %v1386 = vand.u32 %v1385, 4294901760
    %1387 = vmatpush1.msra.mxu0 %v1386
    %1388 = vmatprep.subr.mxu0 0.0
    %v1389 = vand.u32 %v898, 4294901760
    %v1390 = vsub.f32 %v898, %v1389
    %v1391 = vand.u32 %v1390, 4294901760
    %1392 = vmatpush1.msra.mxu0 %v1391
    %1393 = vmatprep.subr.mxu0 0.0
    %v1394 = vand.u32 %v897, 4294901760
    %v1395 = vsub.f32 %v897, %v1394
    %v1396 = vand.u32 %v1395, 4294901760
    %1397 = vmatpush1.msra.mxu0 %v1396
    %1398 = vmatprep.subr.mxu0 0.0
    %1399 = vmatpush2.msra.mxu0 0.0
    %1400 = vmatprep.subr.mxu0 0.0
    %1401 = vmatpush2.msra.mxu0 0.0
    %1402 = vmatprep.subr.mxu0 0.0
    %1403 = vmatpush2.msra.mxu0 0.0
    %1404 = vmatprep.subr.mxu0 0.0
    %1405 = vmatpush2.msra.mxu0 0.0
    %1406 = vmatprep.subr.mxu0 0.0
    %1407 = vmatpush2.msra.mxu0 0.0
    %1408 = vmatprep.subr.mxu0 0.0
    %1409 = vmatpush2.msra.mxu0 0.0
    %1410 = vmatprep.subr.mxu0 0.0
    %1411 = vmatpush2.msra.mxu0 0.0
    %1412 = vmatprep.subr.mxu0 0.0
    %1413 = vmatpush2.msra.mxu0 0.0
    %1414 = vmatprep.subr.mxu0 0.0
    %1415 = vmatpush2.msra.mxu0 0.0
    %1416 = vmatprep.subr.mxu0 0.0
    %1417 = vmatpush2.msra.mxu0 0.0
    %1418 = vmatprep.subr.mxu0 0.0
    %1419 = vmatpush2.msra.mxu0 0.0
    %1420 = vmatprep.subr.mxu0 0.0
    %1421 = vmatpush2.msra.mxu0 0.0
    %1422 = vmatprep.subr.mxu0 0.0
    %1423 = vmatpush2.msra.mxu0 0.0
    %1424 = vmatprep.subr.mxu0 0.0
    %1425 = vmatpush2.msra.mxu0 0.0
    %1426 = vmatprep.subr.mxu0 0.0
    %1427 = vmatpush2.msra.mxu0 0.0
    %1428 = vmatprep.subr.mxu0 0.0
    %1429 = vmatpush2.msra.mxu0 0.0
    %1430 = vmatprep.mubr.f32.mxu0 0.0
    %v1431 = vand.u32 %v923, 4294901760
    %1432 = vmatmul.mubr.f32.gmra.mxu0 %v1431
    %v1433 = vpop.f32.mrf.mxu0
    %v1434 = vadd.f32 %v1327, %v1433
    %v1435 = vpop.f32.mrf.mxu0
    %1436 = vmatprep.mubr.f32.mxu0 0.0
    %v1437 = vand.u32 %v926, 4294901760
    %1438 = vmatmul.mubr.f32.gmra.mxu0 %v1437
    %v1439 = vpop.f32.mrf.mxu0
    %v1440 = vadd.f32 %v1335, %v1439
    %v1441 = vpop.f32.mrf.mxu0
    %1442 = vmatprep.mubr.f32.mxu0 0.0
    %v1443 = vand.u32 %v929, 4294901760
    %1444 = vmatmul.mubr.f32.gmra.mxu0 %v1443
    %v1445 = vpop.f32.mrf.mxu0
    %v1446 = vadd.f32 %v1343, %v1445
    %v1447 = vpop.f32.mrf.mxu0
    %1448 = vmatprep.mubr.f32.mxu0 0.0
    %v1449 = vand.u32 %v932, 4294901760
    %1450 = vmatmul.mubr.f32.gmra.mxu0 %v1449
    %v1451 = vpop.f32.mrf.mxu0
    %v1452 = vadd.f32 %v1351, %v1451
    %v1453 = vpop.f32.mrf.mxu0
    %1454 = vdwg.mxu0
    %1455 = vmatprep.subr.mxu0 0.0
    %1456 = vmatpush1.msra.mxu0 0.0
    %1457 = vmatprep.subr.mxu0 0.0
    %1458 = vmatpush1.msra.mxu0 0.0
    %1459 = vmatprep.subr.mxu0 0.0
    %1460 = vmatpush1.msra.mxu0 0.0
    %1461 = vmatprep.subr.mxu0 0.0
    %1462 = vmatpush1.msra.mxu0 0.0
    %1463 = vmatprep.subr.mxu0 0.0
    %1464 = vmatpush1.msra.mxu0 0.0
    %1465 = vmatprep.subr.mxu0 0.0
    %1466 = vmatpush1.msra.mxu0 0.0
    %1467 = vmatprep.subr.mxu0 0.0
    %1468 = vmatpush1.msra.mxu0 0.0
    %1469 = vmatprep.subr.mxu0 0.0
    %1470 = vmatpush1.msra.mxu0 0.0
    %1471 = vmatprep.subr.mxu0 0.0
    %1472 = vmatpush1.msra.mxu0 0.0
    %1473 = vmatprep.subr.mxu0 0.0
    %1474 = vmatpush1.msra.mxu0 0.0
    %1475 = vmatprep.subr.mxu0 0.0
    %1476 = vmatpush1.msra.mxu0 0.0
    %1477 = vmatprep.subr.mxu0 0.0
    %1478 = vmatpush1.msra.mxu0 0.0
    %1479 = vmatprep.subr.mxu0 0.0
    %v1480 = vand.u32 %v900, 4294901760
    %1481 = vmatpush1.msra.mxu0 %v1480
    %1482 = vmatprep.subr.mxu0 0.0
    %v1483 = vand.u32 %v899, 4294901760
    %1484 = vmatpush1.msra.mxu0 %v1483
    %1485 = vmatprep.subr.mxu0 0.0
    %v1486 = vand.u32 %v898, 4294901760
    %1487 = vmatpush1.msra.mxu0 %v1486
    %1488 = vmatprep.subr.mxu0 0.0
    %v1489 = vand.u32 %v897, 4294901760
    %1490 = vmatpush1.msra.mxu0 %v1489
    %1491 = vmatprep.subr.mxu0 0.0
    %1492 = vmatpush2.msra.mxu0 0.0
    %1493 = vmatprep.subr.mxu0 0.0
    %1494 = vmatpush2.msra.mxu0 0.0
    %1495 = vmatprep.subr.mxu0 0.0
    %1496 = vmatpush2.msra.mxu0 0.0
    %1497 = vmatprep.subr.mxu0 0.0
    %1498 = vmatpush2.msra.mxu0 0.0
    %1499 = vmatprep.subr.mxu0 0.0
    %1500 = vmatpush2.msra.mxu0 0.0
    %1501 = vmatprep.subr.mxu0 0.0
    %1502 = vmatpush2.msra.mxu0 0.0
    %1503 = vmatprep.subr.mxu0 0.0
    %1504 = vmatpush2.msra.mxu0 0.0
    %1505 = vmatprep.subr.mxu0 0.0
    %1506 = vmatpush2.msra.mxu0 0.0
    %1507 = vmatprep.subr.mxu0 0.0
    %1508 = vmatpush2.msra.mxu0 0.0
    %1509 = vmatprep.subr.mxu0 0.0
    %1510 = vmatpush2.msra.mxu0 0.0
    %1511 = vmatprep.subr.mxu0 0.0
    %1512 = vmatpush2.msra.mxu0 0.0
    %1513 = vmatprep.subr.mxu0 0.0
    %1514 = vmatpush2.msra.mxu0 0.0
    %1515 = vmatprep.subr.mxu0 0.0
    %1516 = vmatpush2.msra.mxu0 0.0
    %1517 = vmatprep.subr.mxu0 0.0
    %1518 = vmatpush2.msra.mxu0 0.0
    %1519 = vmatprep.subr.mxu0 0.0
    %1520 = vmatpush2.msra.mxu0 0.0
    %1521 = vmatprep.subr.mxu0 0.0
    %1522 = vmatpush2.msra.mxu0 0.0
    %1523 = vmatprep.mubr.f32.mxu0 0.0
    %v1524 = vand.u32 %v923, 4294901760
    %1525 = vmatmul.mubr.f32.gmra.mxu0 %v1524
    %v1526 = vpop.f32.mrf.mxu0
    %v1527 = vadd.f32 %v1434, %v1526
    %v1528 = vpop.f32.mrf.mxu0
    %1529 = vmatprep.mubr.f32.mxu0 0.0
    %v1530 = vand.u32 %v926, 4294901760
    %1531 = vmatmul.mubr.f32.gmra.mxu0 %v1530
    %v1532 = vpop.f32.mrf.mxu0
    %v1533 = vadd.f32 %v1440, %v1532
    %v1534 = vpop.f32.mrf.mxu0
    %1535 = vmatprep.mubr.f32.mxu0 0.0
    %v1536 = vand.u32 %v929, 4294901760
    %1537 = vmatmul.mubr.f32.gmra.mxu0 %v1536
    %v1538 = vpop.f32.mrf.mxu0
    %v1539 = vadd.f32 %v1446, %v1538
    %v1540 = vpop.f32.mrf.mxu0
    %1541 = vmatprep.mubr.f32.mxu0 0.0
    %v1542 = vand.u32 %v932, 4294901760
    %1543 = vmatmul.mubr.f32.gmra.mxu0 %v1542
    %v1544 = vpop.f32.mrf.mxu0
    %v1545 = vadd.f32 %v1452, %v1544
    %v1546 = vpop.f32.mrf.mxu0
    %1547 = vdwg.mxu0
    %v1548 = vtanh.pop %v1527
    %v1549 = vtanh.pop %v1533
    %v1550 = vtanh.pop %v1539
    %v1551 = vtanh.pop %v1545
    %1552 = vset.pattern.permute.xlu0 2
    %1553 = vperm.xlu0 %1552, %v42
    %v1554 = vpop.permute.xlu0 %1553
    %1556 = vset.pattern.permute.xlu0 2
    %1557 = vperm.xlu0 %1556, %v43
    %v1558 = vpop.permute.xlu0 %1557
    %1560 = vset.pattern.permute.xlu0 2
    %1561 = vperm.xlu0 %1560, %v44
    %v1562 = vpop.permute.xlu0 %1561
    %1564 = vset.pattern.permute.xlu0 2
    %1565 = vperm.xlu0 %1564, %v45
    %v1566 = vpop.permute.xlu0 %1565
    %v1568 = vmul.f32 %v1548, %v1554
    %v1569 = vmul.f32 %v1549, %v1558
    %v1570 = vmul.f32 %v1550, %v1562
    %v1571 = vmul.f32 %v1551, %v1566
    %v1572 = vadd.f32 %v1568, %v1569
    %v1573 = vadd.f32 %v1572, %v1570
    %v1574 = vadd.f32 %v1573, %v1571
    %v1575 = vrot.slane %v1574, 4
    %v1576 = vadd.f32 %v1574, %v1575
    %v1577 = vrot.slane %v1576, 2
    %v1578 = vadd.f32 %v1576, %v1577
    %v1579 = vrot.slane %v1578, 1
    %v1580 = vadd.f32 %v1578, %v1579
    %s1581 = sld [smem:[#allocation2]]
    %v1582 = vstv %s1581
    %v1583 = vadd.f32 %v1580, %v1582
    %1584 = vst [vmem:[#allocation3] sm:$0x1] %v1583
    // Predicated region
    $region22: #{tpu_custom_call.1} parent=1 // pred_check
      _
    $region23: #{tpu_custom_call.1} parent=1 // pred_check_branch
      %1586 = sbr.rel (0) target = $region25
    $region24: #{tpu_custom_call.1} parent=1 // pred_region
      %s1588 = ssub.s32 16, 16
      %1589 = vsyncadd [#allocation4], %s1588
      %s1591 = sshll.u32 [#allocation3], 4
      %s1592 = int_to_ptr.vmem [resolvable:$true] %s1591
      %1594 = dma.vmem_to_hbm [thread:$0]  %s1592, 16, %s5, [#allocation4]
    $region25: #{tpu_custom_call.1} parent=1 // pred_fallthru
      _
    // Predicated region
    $region26: #{tpu_custom_call.1} parent=1 // pred_check
      _
    $region27: #{tpu_custom_call.1} parent=1 // pred_check_branch
      %1596 = sbr.rel (0) target = $region29
    $region28: #{tpu_custom_call.1} parent=1 // pred_region
      %1597 = dma.done [#allocation4], 16
    $region29: #{tpu_custom_call.1} parent=1 // pred_fallthru
      _
    %1598 = vsyncpa [#allocation4], 1

</llo_original>
